<compile_context>
chip_gen: v5e
topology: v5e:2x2
jax: 0.10.0
libtpu: 0.0.40
codegen_flags: <defaults>
</compile_context>

<pallas_src>
import jax
import jax.numpy as jnp
from jax import lax
from jax.experimental import pallas as pl
from jax.experimental.pallas import tpu as pltpu


def _round_up(a, b):
    return (a + b - 1) // b * b


def _vq_kernel(wsq_ref, w2_ref, x_ref, idx_ref):
    # wsq_ref: (n_chunks, k_chunk, 1) f32   ||w_k||^2 (padded rows = +inf)
    # w2_ref:  (n_chunks, k_chunk, C)       -2 * w_k in compute dtype (bf16/f32)
    # x_ref:   (1, C, TN)                   input tile, spatial positions on lanes
    # idx_ref: (1, 1, TN) int32             argmin codebook index per position
    n_chunks, k_chunk, _ = w2_ref.shape
    tn = x_ref.shape[-1]
    x = x_ref[0].astype(w2_ref.dtype)                  # (C, TN), cast in VMEM (VPU)

    def body(c, carry):
        run_min, run_idx = carry
        w2c = w2_ref[c]                                # (Kc, C)
        wsqc = wsq_ref[c]                              # (Kc, 1)
        # scores[k, n] = -2 * w_k . x_n  -- lane-dense, MXU, f32 accumulation.
        scores = jnp.dot(w2c, x, preferred_element_type=jnp.float32)
        # dist = ||w||^2 - 2 w.x   (||x||^2 dropped: argmin-invariant over k)
        dist = wsqc + scores                           # (Kc, TN)
        cmin = jnp.min(dist, axis=0, keepdims=True)    # (1, TN)
        row = lax.broadcasted_iota(jnp.int32, dist.shape, 0)
        # First occurrence inside the chunk (matches torch.argmin tie-break).
        cidx = jnp.min(jnp.where(dist == cmin, row, k_chunk),
                       axis=0, keepdims=True) + c * k_chunk
        better = cmin < run_min                        # strict '<': earlier chunk wins ties
        return (jnp.where(better, cmin, run_min),
                jnp.where(better, cidx, run_idx))

    init = (jnp.full((1, tn), jnp.inf, dtype=jnp.float32),
            jnp.zeros((1, tn), dtype=jnp.int32))
    _, run_idx = lax.fori_loop(0, n_chunks, body, init,
                               unroll=(n_chunks <= 8))
    idx_ref[...] = run_idx.reshape(1, 1, tn)


def vector_quantize(x, embedding_weight, *, tile_n=2048, k_chunk=256,
                    compute_dtype=jnp.bfloat16, return_indices=False):
    """VQ-VAE VectorQuantizer.forward.

    x: (B, C, D, H, W) float32; embedding_weight: (K, C) float32.
    compute_dtype: dtype fed to the MXU for the w.x scores. bf16 is the fast
    path (near-tie argmins may differ from fp32); f32 matches the PyTorch
    reference exactly.
    """
    B, C, D, H, W = x.shape
    K, Ce = embedding_weight.shape
    assert Ce == C, "embedding_dim must equal channel dim"

    S = D * H * W
    # Lane tile: multiple of 128, no larger than the (128-rounded) spatial extent.
    # NOTE: defaults are sized for production shapes (K=1024, C=256); don't tune
    # against the toy shapes in __main__.
    tile_n = max(128, (int(tile_n) // 128) * 128)
    tile_n = min(tile_n, _round_up(S, 128))
    n_s = pl.cdiv(S, tile_n)

    # Codebook chunking along K (streamed argmin). k_chunk multiple of 16 so
    # bf16 sublane packing stays aligned.
    k_chunk = max(16, (int(k_chunk) // 16) * 16)
    k_chunk = min(k_chunk, _round_up(K, 16))
    K_pad = _round_up(K, k_chunk)
    n_chunks = K_pad // k_chunk

    # Codebook prep (tiny, hoisted out of the grid): ||w||^2 and -2*w.
    w_f32 = embedding_weight.astype(jnp.float32)
    wsq = jnp.sum(w_f32 * w_f32, axis=1, keepdims=True)        # (K, 1)
    w2 = (-2.0 * w_f32).astype(compute_dtype)                  # (K, C), '-2' folded in
    if K_pad != K:
        wsq = jnp.pad(wsq, ((0, K_pad - K), (0, 0)), constant_values=float("inf"))
        w2 = jnp.pad(w2, ((0, K_pad - K), (0, 0)))
    wsq = wsq.reshape(n_chunks, k_chunk, 1)
    w2 = w2.reshape(n_chunks, k_chunk, C)

    # Native layout: no HBM transpose and no jnp.pad of x. Spatial axis S sits
    # on lanes; a partial last tile is handled by Pallas edge blocks.
    x3 = x.reshape(B, C, S)

    def _run(single_buffer_consts):
        const_kw = dict(pipeline_mode=pl.Buffered(1)) if single_buffer_consts else {}
        grid_spec = pltpu.PrefetchScalarGridSpec(
            num_scalar_prefetch=0,
            grid=(B, n_s),
            in_specs=[
                pl.BlockSpec((n_chunks, k_chunk, 1), lambda b, s: (0, 0, 0), **const_kw),
                pl.BlockSpec((n_chunks, k_chunk, C), lambda b, s: (0, 0, 0), **const_kw),
                pl.BlockSpec((1, C, tile_n), lambda b, s: (b, 0, s)),
            ],
            out_specs=pl.BlockSpec((1, 1, tile_n), lambda b, s: (b, 0, s)),
        )
        return pl.pallas_call(
            _vq_kernel,
            out_shape=jax.ShapeDtypeStruct((B, 1, S), jnp.int32),
            grid_spec=grid_spec,
            compiler_params=pltpu.CompilerParams(
                dimension_semantics=("parallel", "parallel")),
        )(wsq, w2, x3)

    try:
        idx = _run(True)       # constants single-buffered (VMEM headroom)
    except Exception:          # fallback if this Pallas rejects Buffered(1)
        idx = _run(False)

    # Wrapper glue (pure layout plumbing / tiny table gather):
    #   * K-entry codebook gather  quant[n] = w[idx[n]]
    #   * reproduce the reference's `.view(x.shape)` exactly -- the channel-last
    #     flat buffer is reinterpreted as NCDHW with NO permute back
    #     (intentional; matches the PyTorch code verbatim).
    # TODO(synk): fuse the gather into the kernel (one-hot @ codebook) only if
    # profiling shows the XLA gather dominating.
    flat_idx = idx[:, 0, :].reshape(-1)                        # (N,) ordered (b, d, h, w)
    quant = embedding_weight[flat_idx].reshape(x.shape)
    if return_indices:
        return quant, flat_idx
    return quant


def _reference_jax(x, w):
    # Pure-JAX mirror of the PyTorch VectorQuantizer.forward, for checking.
    C = x.shape[1]
    flat_x = jnp.transpose(x, (0, 2, 3, 4, 1)).reshape(-1, C)
    dist = (jnp.sum(flat_x ** 2, axis=1, keepdims=True)
            + jnp.sum(w ** 2, axis=1)
            - 2.0 * flat_x @ w.T)
    idx = jnp.argmin(dist, axis=1)
    return w[idx].reshape(x.shape), idx


if __name__ == "__main__":
    key = jax.random.PRNGKey(0)
    k_x, k_w = jax.random.split(key)

    # Small shapes consistent with the module (real VQVAE uses K=1024, C=256).
    num_embeddings = 64
    embedding_dim = 8                      # == channel dim of the encoder output
    B, C, D, H, W = 2, embedding_dim, 4, 16, 16       # S = 1024, N = 2048

    x = jax.random.normal(k_x, (B, C, D, H, W), dtype=jnp.float32)
    # nn.Embedding weight init: uniform(-1/num_embeddings, 1/num_embeddings)
    embedding_weight = jax.random.uniform(
        k_w, (num_embeddings, embedding_dim), dtype=jnp.float32,
        minval=-1.0 / num_embeddings, maxval=1.0 / num_embeddings)

    ref_q, ref_idx = _reference_jax(x, embedding_weight)

    # (1) Exact-semantics check: f32 compute path vs. the PyTorch-mirror reference.
    out_f32 = jax.block_until_ready(
        vector_quantize(x, embedding_weight, compute_dtype=jnp.float32))
    assert out_f32.shape == x.shape
    assert jnp.allclose(out_f32, ref_q, atol=1e-5, rtol=1e-5)

    # (2) Fast path (bf16 MXU feed, the default): near-tie argmins may
    #     legitimately differ from the fp32 reference, so require high (not
    #     perfect) index agreement.
    out_bf16, idx_bf16 = vector_quantize(x, embedding_weight, return_indices=True)
    out_bf16 = jax.block_until_ready(out_bf16)
    assert out_bf16.shape == x.shape
    agreement = float(jnp.mean((idx_bf16 == ref_idx).astype(jnp.float32)))
    assert agreement >= 0.97, f"bf16/fp32 argmin agreement too low: {agreement:.4f}"

    print("KERNEL_OK")
</pallas_src>

<mosaic_0001>
module attributes {stable_mosaic.version = 11 : i64} {
  func.func @_vq_kernel(%arg0: i32, %arg1: i32, %arg2: memref<1x64x1xf32, #tpu.memory_space<vmem>>, %arg3: memref<1x64x8xf32, #tpu.memory_space<vmem>>, %arg4: memref<1x8x1024xf32, #tpu.memory_space<vmem>>, %arg5: memref<1x1x1024xi32, #tpu.memory_space<vmem>>) attributes {dimension_semantics = [#tpu.dimension_semantics<parallel>, #tpu.dimension_semantics<parallel>], iteration_bounds = array<i64: 2, 1>, scalar_prefetch = 0 : i64, scratch_operands = 0 : i64, tpu.core_type = #tpu.core_type<tc>, window_params = [{pipeline_mode = #tpu.pipeline_mode<synchronous>, transform_indices = @transform_0, window_bounds = array<i64: 1, 64, 1>}, {pipeline_mode = #tpu.pipeline_mode<synchronous>, transform_indices = @transform_1, window_bounds = array<i64: 1, 64, 8>}, {transform_indices = @transform_2, window_bounds = array<i64: 1, 8, 1024>}, {transform_indices = @transform_3, window_bounds = array<i64: 1, 1, 1024>}]} {
    %c0 = arith.constant 0 : index
    %c0_0 = arith.constant 0 : index
    %c0_1 = arith.constant 0 : index
    %0 = vector.load %arg4[%c0, %c0_0, %c0_1] : memref<1x8x1024xf32, #tpu.memory_space<vmem>>, vector<1x8x1024xf32>
    %1 = vector.shape_cast %0 : vector<1x8x1024xf32> to vector<8x1024xf32>
    %cst = arith.constant 0x7F800000 : f32
    %2 = vector.broadcast %cst : f32 to vector<1x1024xf32>
    %c0_i32 = arith.constant 0 : i32
    %3 = vector.broadcast %c0_i32 : i32 to vector<1x1024xi32>
    %c0_i32_2 = arith.constant 0 : i32
    %4 = arith.index_cast %c0_i32_2 : i32 to index
    %c0_3 = arith.constant 0 : index
    %c0_4 = arith.constant 0 : index
    %5 = vector.load %arg3[%4, %c0_3, %c0_4] : memref<1x64x8xf32, #tpu.memory_space<vmem>>, vector<1x64x8xf32>
    %6 = vector.shape_cast %5 : vector<1x64x8xf32> to vector<64x8xf32>
    %7 = arith.index_cast %c0_i32_2 : i32 to index
    %c0_5 = arith.constant 0 : index
    %c0_6 = arith.constant 0 : index
    %8 = vector.load %arg2[%7, %c0_5, %c0_6] : memref<1x64x1xf32, #tpu.memory_space<vmem>>, vector<1x64x1xf32>
    %9 = vector.shape_cast %8 : vector<1x64x1xf32> to vector<64x1xf32>
    %cst_7 = arith.constant dense<0.000000e+00> : vector<64x1024xf32>
    %10 = tpu.matmul %6, %1, %cst_7 {dimension_numbers = #tpu.dot_dimension_numbers<[1], [0], [0], [1], [0, 0, 1, 1], [], []>} : vector<64x8xf32>, vector<8x1024xf32>, vector<64x1024xf32> -> vector<64x1024xf32>
    %11 = vector.broadcast %9 : vector<64x1xf32> to vector<64x1024xf32>
    %12 = arith.addf %11, %10 : vector<64x1024xf32>
    %cst_8 = arith.constant dense<0x7F800000> : vector<1024xf32>
    %13 = vector.multi_reduction <minimumf>, %12, %cst_8 [0] : vector<64x1024xf32> to vector<1024xf32>
    %14 = vector.shape_cast %13 : vector<1024xf32> to vector<1x1024xf32>
    %15 = tpu.iota {dimensions = array<i32: 0>} : vector<64x1024xi32>
    %16 = vector.broadcast %14 : vector<1x1024xf32> to vector<64x1024xf32>
    %17 = arith.cmpf oeq, %12, %16 : vector<64x1024xf32>
    %c64_i32 = arith.constant 64 : i32
    %18 = vector.broadcast %c64_i32 : i32 to vector<64x1024xi32>
    %19 = arith.select %17, %15, %18 : vector<64x1024xi1>, vector<64x1024xi32>
    %cst_9 = arith.constant dense<2147483647> : vector<1024xi32>
    %20 = vector.multi_reduction <minsi>, %19, %cst_9 [0] : vector<64x1024xi32> to vector<1024xi32>
    %21 = vector.shape_cast %20 : vector<1024xi32> to vector<1x1024xi32>
    %c64_i32_10 = arith.constant 64 : i32
    %22 = arith.muli %c0_i32_2, %c64_i32_10 : i32
    %23 = vector.broadcast %22 : i32 to vector<1x1024xi32>
    %24 = arith.addi %21, %23 : vector<1x1024xi32>
    %25 = arith.cmpf olt, %14, %2 : vector<1x1024xf32>
    %26 = arith.select %25, %14, %2 : vector<1x1024xi1>, vector<1x1024xf32>
    %27 = arith.select %25, %24, %3 : vector<1x1024xi1>, vector<1x1024xi32>
    %c1_i32 = arith.constant 1 : i32
    %28 = vector.shape_cast %27 : vector<1x1024xi32> to vector<1x1x1024xi32>
    %c0_11 = arith.constant 0 : index
    %c0_12 = arith.constant 0 : index
    %c0_13 = arith.constant 0 : index
    %29 = vector.load %arg5[%c0_11, %c0_12, %c0_13] : memref<1x1x1024xi32, #tpu.memory_space<vmem>>, vector<1x1x1024xi32>
    tpu.vector_store %arg5[%c0_11, %c0_12, %c0_13], %28 {strides = array<i32>} : memref<1x1x1024xi32, #tpu.memory_space<vmem>>, vector<1x1x1024xi32>,
    return
  }
  func.func @transform_0(%arg0: i32, %arg1: i32) -> (i32, i32, i32) {
    %c0_i32 = arith.constant 0 : i32
    %c0_i32_0 = arith.constant 0 : i32
    %c0_i32_1 = arith.constant 0 : i32
    %c0_i32_2 = arith.constant 0 : i32
    return %c0_i32, %c0_i32_0, %c0_i32_1 : i32, i32, i32
  }
  func.func @transform_1(%arg0: i32, %arg1: i32) -> (i32, i32, i32) {
    %c0_i32 = arith.constant 0 : i32
    %c0_i32_0 = arith.constant 0 : i32
    %c0_i32_1 = arith.constant 0 : i32
    %c0_i32_2 = arith.constant 0 : i32
    return %c0_i32, %c0_i32_0, %c0_i32_1 : i32, i32, i32
  }
  func.func @transform_2(%arg0: i32, %arg1: i32) -> (i32, i32, i32) {
    %c0_i32 = arith.constant 0 : i32
    %c0_i32_0 = arith.constant 0 : i32
    return %arg0, %c0_i32, %arg1 : i32, i32, i32
  }
  func.func @transform_3(%arg0: i32, %arg1: i32) -> (i32, i32, i32) {
    %c0_i32 = arith.constant 0 : i32
    %c0_i32_0 = arith.constant 0 : i32
    return %arg0, %c0_i32, %arg1 : i32, i32, i32
  }
}

module attributes {stable_mosaic.version = 11 : i64} {
  func.func @_vq_kernel(%arg0: i32, %arg1: i32, %arg2: memref<1x64x1xf32, #tpu.memory_space<vmem>>, %arg3: memref<1x64x8xf32, #tpu.memory_space<vmem>>, %arg4: memref<1x8x1024xf32, #tpu.memory_space<vmem>>, %arg5: memref<1x1x1024xi32, #tpu.memory_space<vmem>>) attributes {dimension_semantics = [#tpu.dimension_semantics<parallel>, #tpu.dimension_semantics<parallel>], iteration_bounds = array<i64: 2, 1>, scalar_prefetch = 0 : i64, scratch_operands = 0 : i64, tpu.core_type = #tpu.core_type<tc>, window_params = [{pipeline_mode = #tpu.pipeline_mode<synchronous>, transform_indices = @transform_0, window_bounds = array<i64: 1, 64, 1>}, {pipeline_mode = #tpu.pipeline_mode<synchronous>, transform_indices = @transform_1, window_bounds = array<i64: 1, 64, 8>}, {transform_indices = @transform_2, window_bounds = array<i64: 1, 8, 1024>}, {transform_indices = @transform_3, window_bounds = array<i64: 1, 1, 1024>}]} {
    %c0 = arith.constant 0 : index
    %c0_0 = arith.constant 0 : index
    %c0_1 = arith.constant 0 : index
    %0 = vector.load %arg4[%c0, %c0_0, %c0_1] : memref<1x8x1024xf32, #tpu.memory_space<vmem>>, vector<1x8x1024xf32>
    %1 = vector.shape_cast %0 : vector<1x8x1024xf32> to vector<8x1024xf32>
    %cst = arith.constant 0x7F800000 : f32
    %2 = vector.broadcast %cst : f32 to vector<1x1024xf32>
    %c0_i32 = arith.constant 0 : i32
    %3 = vector.broadcast %c0_i32 : i32 to vector<1x1024xi32>
    %c0_i32_2 = arith.constant 0 : i32
    %4 = arith.index_cast %c0_i32_2 : i32 to index
    %c0_3 = arith.constant 0 : index
    %c0_4 = arith.constant 0 : index
    %5 = vector.load %arg3[%4, %c0_3, %c0_4] : memref<1x64x8xf32, #tpu.memory_space<vmem>>, vector<1x64x8xf32>
    %6 = vector.shape_cast %5 : vector<1x64x8xf32> to vector<64x8xf32>
    %7 = arith.index_cast %c0_i32_2 : i32 to index
    %c0_5 = arith.constant 0 : index
    %c0_6 = arith.constant 0 : index
    %8 = vector.load %arg2[%7, %c0_5, %c0_6] : memref<1x64x1xf32, #tpu.memory_space<vmem>>, vector<1x64x1xf32>
    %9 = vector.shape_cast %8 : vector<1x64x1xf32> to vector<64x1xf32>
    %cst_7 = arith.constant dense<0.000000e+00> : vector<64x1024xf32>
    %10 = tpu.matmul %6, %1, %cst_7 {dimension_numbers = #tpu.dot_dimension_numbers<[1], [0], [0], [1], [0, 0, 1, 1], [], []>} : vector<64x8xf32>, vector<8x1024xf32>, vector<64x1024xf32> -> vector<64x1024xf32>
    %11 = vector.broadcast %9 : vector<64x1xf32> to vector<64x1024xf32>
    %12 = arith.addf %11, %10 : vector<64x1024xf32>
    %cst_8 = arith.constant dense<0x7F800000> : vector<1024xf32>
    %13 = vector.multi_reduction <minimumf>, %12, %cst_8 [0] : vector<64x1024xf32> to vector<1024xf32>
    %14 = vector.shape_cast %13 : vector<1024xf32> to vector<1x1024xf32>
    %15 = tpu.iota {dimensions = array<i32: 0>} : vector<64x1024xi32>
    %16 = vector.broadcast %14 : vector<1x1024xf32> to vector<64x1024xf32>
    %17 = arith.cmpf oeq, %12, %16 : vector<64x1024xf32>
    %c64_i32 = arith.constant 64 : i32
    %18 = vector.broadcast %c64_i32 : i32 to vector<64x1024xi32>
    %19 = arith.select %17, %15, %18 : vector<64x1024xi1>, vector<64x1024xi32>
    %cst_9 = arith.constant dense<2147483647> : vector<1024xi32>
    %20 = vector.multi_reduction <minsi>, %19, %cst_9 [0] : vector<64x1024xi32> to vector<1024xi32>
    %21 = vector.shape_cast %20 : vector<1024xi32> to vector<1x1024xi32>
    %c64_i32_10 = arith.constant 64 : i32
    %22 = arith.muli %c0_i32_2, %c64_i32_10 : i32
    %23 = vector.broadcast %22 : i32 to vector<1x1024xi32>
    %24 = arith.addi %21, %23 : vector<1x1024xi32>
    %25 = arith.cmpf olt, %14, %2 : vector<1x1024xf32>
    %26 = arith.select %25, %14, %2 : vector<1x1024xi1>, vector<1x1024xf32>
    %27 = arith.select %25, %24, %3 : vector<1x1024xi1>, vector<1x1024xi32>
    %c1_i32 = arith.constant 1 : i32
    %28 = vector.shape_cast %27 : vector<1x1024xi32> to vector<1x1x1024xi32>
    %c0_11 = arith.constant 0 : index
    %c0_12 = arith.constant 0 : index
    %c0_13 = arith.constant 0 : index
    %29 = vector.load %arg5[%c0_11, %c0_12, %c0_13] : memref<1x1x1024xi32, #tpu.memory_space<vmem>>, vector<1x1x1024xi32>
    tpu.vector_store %arg5[%c0_11, %c0_12, %c0_13], %28 {strides = array<i32>} : memref<1x1x1024xi32, #tpu.memory_space<vmem>>, vector<1x1x1024xi32>,
    return
  }
  func.func @transform_0(%arg0: i32, %arg1: i32) -> (i32, i32, i32) {
    %c0_i32 = arith.constant 0 : i32
    %c0_i32_0 = arith.constant 0 : i32
    %c0_i32_1 = arith.constant 0 : i32
    %c0_i32_2 = arith.constant 0 : i32
    return %c0_i32, %c0_i32_0, %c0_i32_1 : i32, i32, i32
  }
  func.func @transform_1(%arg0: i32, %arg1: i32) -> (i32, i32, i32) {
    %c0_i32 = arith.constant 0 : i32
    %c0_i32_0 = arith.constant 0 : i32
    %c0_i32_1 = arith.constant 0 : i32
    %c0_i32_2 = arith.constant 0 : i32
    return %c0_i32, %c0_i32_0, %c0_i32_1 : i32, i32, i32
  }
  func.func @transform_2(%arg0: i32, %arg1: i32) -> (i32, i32, i32) {
    %c0_i32 = arith.constant 0 : i32
    %c0_i32_0 = arith.constant 0 : i32
    return %arg0, %c0_i32, %arg1 : i32, i32, i32
  }
  func.func @transform_3(%arg0: i32, %arg1: i32) -> (i32, i32, i32) {
    %c0_i32 = arith.constant 0 : i32
    %c0_i32_0 = arith.constant 0 : i32
    return %arg0, %c0_i32, %arg1 : i32, i32, i32
  }
}

</mosaic_0001>

<llo_original>
// kernel: tpu_custom_call.1
$region0: #{tpu_custom_call.1}
  #allocation0 [shape = 'u32[]', space=smem, size = 0x4, offset = 0x4, fixed_abs, tag = 'smem constant byte address 0x4 - core index']
  #allocation1 [shape = 'u32[72,128]{1,0:T(1,128)}', space=vmem, size = 0x9000, scoped, tag = 'internal scratch']
  %s0 = inlined_call_operand.vmem [shape: f32[1,64,1], index: 0, kind: input, shape index: {}]
  %s1 = inlined_call_operand.vmem [shape: f32[1,64,8], index: 1, kind: input, shape index: {}]
  %s2 = inlined_call_operand.vmem [shape: f32[2,8,1024], index: 2, kind: input, shape index: {}]
  %s3 = inlined_call_operand.hbm [shape: s32[2,1,1024], index: 3, kind: output, shape index: {}]
  %s4 = sld [smem:[#allocation0]]
  $region45: #{tpu_custom_call.1} parent=0
    _
  %s6 = ssub.s32 1, %s4
  %s7 = scalar_select 0, %s6, %s4
  $region1: #{tpu_custom_call.1} parent=0
    #allocation2 [shape = 'u8[8192]{0}', space=vmem, size = 0x2000, scoped, tag = 'output window, operand 0']
    #allocation3 [shape = 's32[2]{0}', space=sflag, size = 0x8, scoped, tag = 'scoped memory for tpu_custom_call.1']
    %8 = vsyncpa [#allocation3], 0
    %s9 = scalar_lea.sflag [#allocation3], 1
    %10 = vsyncpa %s9, 0
    loop: start=0, step=1, limit=4
    $region2: #{tpu_custom_call.1} parent=1 // loop_pre_header
      _
    $region3: #{tpu_custom_call.1} parent=1 // loop_header
      %s12 = sphi 0, %s16
      %p13 = scmp.ge.s32.totalorder %s12, 4
      %s19 = sphi 0, %s31
      %s20 = sphi 0, %s27
      %s21 = sphi 0, %s19
      %s22 = sphi 0, %s20
      %s23 = sphi 0, %s21
      %s24 = sphi 0, %s22
      %s32 = sphi 0, %s32
      %s34 = sphi 0, %s32
      %s35 = sphi 0, %s34
      %s49 = sphi 0, %s35
      %s53 = sphi 0, %s53
      %s55 = sphi 0, %s53
      %s56 = sphi 0, %s55
      %s70 = sphi 0, %s56
      %s78 = sphi 0, %s80
      %s81 = sphi 0, %s78
      %s82 = sphi 0, %s81
      %s98 = sphi 0, %s82
      %s106 = sphi 0, %s108
      %s109 = sphi 0, %s106
      %s110 = sphi 0, %s109
      %s126 = sphi 0, %s110
    $region4: #{tpu_custom_call.1} parent=1 // loop_header_branch
      %15 = sbr.rel (%p13) target = $region8
    $region5: #{tpu_custom_call.1} parent=1 // loop_body
      %s17 = ssub.s32 %s12, 1
      %s18 = ssub.s32 %s12, 2
      %s25 = sadd.s32 1, %s20
      %p26 = scmp.ge.s32.totalorder %s25, 1
      %s27 = scalar_select %p26, 0, %s25
      %s28 = sadd.s32 1, %s19
      %s29 = scalar_select %p26, %s28, %s19
      %p30 = scmp.ge.s32.totalorder %s29, 2
      %s31 = scalar_select %p30, 0, %s29
      %s33 = sadd.s32 %s32, 1
      %p36 = scmp.eq.s32.totalorder %s12, 1
      %p37 = scmp.ne.s32.totalorder %s32, %s34
      %p38 = scmp.eq.s32.totalorder %s12, 0
      %p39 = por %p37, %p38
      %p40 = scmp.ne.s32.totalorder %s32, %s34
      %p41 = scmp.eq.s32.totalorder %s17, 1
      %p42 = por %p40, %p41
      %p43 = scmp.ne.s32.totalorder %s34, %s35
      %p44 = scmp.eq.s32.totalorder %s17, 0
      %p45 = por %p43, %p44
      %p46 = scmp.ne.s32.totalorder %s34, %s35
      %p47 = scmp.eq.s32.totalorder %s18, 1
      %p48 = por %p46, %p47
      %p50 = scmp.ne.s32.totalorder %s35, %s49
      %p51 = scmp.eq.s32.totalorder %s18, 0
      %p52 = por %p50, %p51
      %s54 = sadd.s32 %s53, 1
      %p57 = scmp.eq.s32.totalorder %s12, 1
      %p58 = scmp.ne.s32.totalorder %s53, %s55
      %p59 = scmp.eq.s32.totalorder %s12, 0
      %p60 = por %p58, %p59
      %p61 = scmp.ne.s32.totalorder %s53, %s55
      %p62 = scmp.eq.s32.totalorder %s17, 1
      %p63 = por %p61, %p62
      %p64 = scmp.ne.s32.totalorder %s55, %s56
      %p65 = scmp.eq.s32.totalorder %s17, 0
      %p66 = por %p64, %p65
      %p67 = scmp.ne.s32.totalorder %s55, %s56
      %p68 = scmp.eq.s32.totalorder %s18, 1
      %p69 = por %p67, %p68
      %p71 = scmp.ne.s32.totalorder %s56, %s70
      %p72 = scmp.eq.s32.totalorder %s18, 0
      %p73 = por %p71, %p72
      %s74 = ssub.s32 %s19, %s31
      %s75 = ssub.s32 %s20, %s27
      %s76 = sor.u32 %s74, %s75
      %p77 = scmp.eq.s32.totalorder %s76, 0
      %s79 = sadd.s32 %s78, 1
      %s80 = scalar_select %p77, %s78, %s79
      %p83 = pneg %p77
      %p84 = scmp.eq.s32.totalorder %s12, 1
      %p85 = por %p83, %p84
      %p86 = scmp.ne.s32.totalorder %s78, %s81
      %p87 = scmp.eq.s32.totalorder %s12, 0
      %p88 = por %p86, %p87
      %p89 = scmp.ne.s32.totalorder %s78, %s81
      %p90 = scmp.eq.s32.totalorder %s17, 1
      %p91 = por %p89, %p90
      %p92 = scmp.ne.s32.totalorder %s81, %s82
      %p93 = scmp.eq.s32.totalorder %s17, 0
      %p94 = por %p92, %p93
      %p95 = scmp.ne.s32.totalorder %s81, %s82
      %p96 = scmp.eq.s32.totalorder %s18, 1
      %p97 = por %p95, %p96
      %p99 = scmp.ne.s32.totalorder %s82, %s98
      %p100 = scmp.eq.s32.totalorder %s18, 0
      %p101 = por %p99, %p100
      %s102 = ssub.s32 %s19, %s31
      %s103 = ssub.s32 %s20, %s27
      %s104 = sor.u32 %s102, %s103
      %p105 = scmp.eq.s32.totalorder %s104, 0
      %s107 = sadd.s32 %s106, 1
      %s108 = scalar_select %p105, %s106, %s107
      %p111 = pneg %p105
      %p112 = scmp.eq.s32.totalorder %s12, 1
      %p113 = por %p111, %p112
      %p114 = scmp.ne.s32.totalorder %s106, %s109
      %p115 = scmp.eq.s32.totalorder %s12, 0
      %p116 = por %p114, %p115
      %p117 = scmp.ne.s32.totalorder %s106, %s109
      %p118 = scmp.eq.s32.totalorder %s17, 1
      %p119 = por %p117, %p118
      %p120 = scmp.ne.s32.totalorder %s109, %s110
      %p121 = scmp.eq.s32.totalorder %s17, 0
      %p122 = por %p120, %p121
      %p123 = scmp.ne.s32.totalorder %s109, %s110
      %p124 = scmp.eq.s32.totalorder %s18, 1
      %p125 = por %p123, %p124
      %p127 = scmp.ne.s32.totalorder %s110, %s126
      %p128 = scmp.eq.s32.totalorder %s18, 0
      %p129 = por %p127, %p128
      %p130 = scmp.le.s32.totalorder 1, %s12
      %p131 = scmp.lt.s32.totalorder %s12, 3
      %p132 = pnand %p130, %p131
      %p133 = pneg %p132
      // Predicated region
      $region9: #{tpu_custom_call.1} parent=5 // pred_check
        _
      $region10: #{tpu_custom_call.1} parent=5 // pred_check_branch
        %135 = sbr.rel (%p132) target = $region12
      $region11: #{tpu_custom_call.1} parent=5 // pred_region
        %s136 = ssub.s32 %s12, 1
        // Predicated region
        $region13: #{tpu_custom_call.1} parent=11 // pred_check
          %p137 = pneg %p45
        $region14: #{tpu_custom_call.1} parent=11 // pred_check_branch
          %139 = sbr.rel (%p137) target = $region16
        $region15: #{tpu_custom_call.1} parent=11 // pred_region
          _
        $region16: #{tpu_custom_call.1} parent=11 // pred_fallthru
          _
        // Predicated region
        $region17: #{tpu_custom_call.1} parent=11 // pred_check
          %p140 = pneg %p66
        $region18: #{tpu_custom_call.1} parent=11 // pred_check_branch
          %142 = sbr.rel (%p140) target = $region20
        $region19: #{tpu_custom_call.1} parent=11 // pred_region
          _
        $region20: #{tpu_custom_call.1} parent=11 // pred_fallthru
          _
      $region12: #{tpu_custom_call.1} parent=5 // pred_fallthru
        _
      %p143 = scmp.lt.s32.totalorder %s12, 2
      // Predicated region
      $region21: #{tpu_custom_call.1} parent=5 // pred_check
        %p144 = pneg %p143
      $region22: #{tpu_custom_call.1} parent=5 // pred_check_branch
        %146 = sbr.rel (%p144) target = $region24
      $region23: #{tpu_custom_call.1} parent=5 // pred_region
        // Predicated region
        $region25: #{tpu_custom_call.1} parent=23 // pred_check
          %p147 = pneg %p88
        $region26: #{tpu_custom_call.1} parent=23 // pred_check_branch
          %149 = sbr.rel (%p147) target = $region28
        $region27: #{tpu_custom_call.1} parent=23 // pred_region
          %s150 = smul.u32 8, %s20
          %p151 = scmp.lt.s32.totalorder %s19, 1
          %s152 = scalar_select %p151, %s19, 1
          %p153 = scmp.lt.s32.totalorder %s150, 7
          %s154 = scalar_select %p153, %s150, 7
          %s155 = smul.addr %s152, 8
          %s156 = sadd.s32 %s154, %s155
          %s157 = smul.addr %s156, 8
          %s158 = scalar_lea.vmem %s2, %s157
          %s159 = smul.u32 8, %s20
        $region28: #{tpu_custom_call.1} parent=23 // pred_fallthru
          _
      $region24: #{tpu_custom_call.1} parent=5 // pred_fallthru
        _
      %p160 = scmp.le.s32.totalorder 1, %s12
      %p161 = scmp.lt.s32.totalorder %s12, 3
      %p162 = pnand %p160, %p161
      %p163 = pneg %p162
      // Predicated region
      $region29: #{tpu_custom_call.1} parent=5 // pred_check
        _
      $region30: #{tpu_custom_call.1} parent=5 // pred_check_branch
        %165 = sbr.rel (%p162) target = $region32
      $region31: #{tpu_custom_call.1} parent=5 // pred_region
        %s166 = ssub.s32 %s12, 1
        %p167 = pneg %p45
        %p168 = pneg %p42
        %p169 = pneg %p66
        %p170 = pneg %p63
        %s171 = smul.u32 8, %s22
        %p172 = scmp.lt.s32.totalorder %s21, 1
        %s173 = scalar_select %p172, %s21, 1
        %p174 = scmp.lt.s32.totalorder %s171, 7
        %s175 = scalar_select %p174, %s171, 7
        %s176 = smul.addr %s173, 8
        %s177 = sadd.s32 %s175, %s176
        %s178 = smul.addr %s177, 8
        %s179 = scalar_lea.vmem %s2, %s178
        %p180 = pneg %p94
        %p181 = pneg %p91
        %p182 = pneg %p122
        %p183 = pneg %p119
        %s184 = sand.u32 %s109, 1
        %s185 = scalar_lea.sflag [#allocation3], %s184
        %s186 = sand.u32 %s109, 1
        %s187 = smul.addr %s186, 8
        %s188 = scalar_lea.vmem [#allocation2], %s187
        %s189 = smul.u32 8, %s22
        %p190 = scmp.lt.s32.totalorder %s21, 1
        %s191 = scalar_select %p190, %s21, 1
        %p192 = scmp.lt.s32.totalorder %s189, 7
        %s193 = scalar_select %p192, %s189, 7
        %s194 = smul.addr %s191, 8
        %s195 = sadd.s32 %s193, %s194
        %s196 = smul.addr %s195, 8
        %s197 = scalar_lea.vmem %s2, %s196
        %s198 = smul.u32 8, %s22
        %s199 = smul.u32 8, %s22
        %v200 = vld [vmem:[%s197] sm:$0xff]
        %v201 = vld [vmem:[%s197 + $0x8] sm:$0xff]
        %v202 = vld [vmem:[%s197 + $0x10] sm:$0xff]
        %v203 = vld [vmem:[%s197 + $0x18] sm:$0xff]
        %v204 = vld [vmem:[%s197 + $0x20] sm:$0xff]
        %v205 = vld [vmem:[%s197 + $0x28] sm:$0xff]
        %v206 = vld [vmem:[%s197 + $0x30] sm:$0xff]
        %v207 = vld [vmem:[%s197 + $0x38] sm:$0xff]
        %v208 = vld [vmem:[%s1] sm:$0xff]
        %v209 = vld [vmem:[%s1 + $0x8] sm:$0xff]
        %v210 = vld [vmem:[%s1 + $0x10] sm:$0xff]
        %v211 = vld [vmem:[%s1 + $0x18] sm:$0xff]
        %v212 = vld [vmem:[%s1 + $0x20] sm:$0xff]
        %v213 = vld [vmem:[%s1 + $0x28] sm:$0xff]
        %v214 = vld [vmem:[%s1 + $0x30] sm:$0xff]
        %v215 = vld [vmem:[%s1 + $0x38] sm:$0xff]
        %v216 = vld [vmem:[%s0] sm:$0xff]
        %v217 = vld [vmem:[%s0 + $0x8] sm:$0xff]
        %v218 = vld [vmem:[%s0 + $0x10] sm:$0xff]
        %v219 = vld [vmem:[%s0 + $0x18] sm:$0xff]
        %v220 = vld [vmem:[%s0 + $0x20] sm:$0xff]
        %v221 = vld [vmem:[%s0 + $0x28] sm:$0xff]
        %v222 = vld [vmem:[%s0 + $0x30] sm:$0xff]
        %v223 = vld [vmem:[%s0 + $0x38] sm:$0xff]
        %vm224 = vcmask 64512
        %v226 = vsel %vm224, %v208, 0
        %v229 = vsel %vm224, %v209, 0
        %v232 = vsel %vm224, %v210, 0
        %v235 = vsel %vm224, %v211, 0
        %v238 = vsel %vm224, %v212, 0
        %v241 = vsel %vm224, %v213, 0
        %v244 = vsel %vm224, %v214, 0
        %v247 = vsel %vm224, %v215, 0
        %249 = vmatpush.msra.mxu0 0.0
        %250 = vmatpush.msra.mxu0 0.0
        %251 = vmatpush.msra.mxu0 0.0
        %252 = vmatpush.msra.mxu0 0.0
        %253 = vmatpush.msra.mxu0 0.0
        %254 = vmatpush.msra.mxu0 0.0
        %255 = vmatpush.msra.mxu0 0.0
        %256 = vmatpush.msra.mxu0 0.0
        %257 = vmatpush.msra.mxu0 0.0
        %258 = vmatpush.msra.mxu0 0.0
        %259 = vmatpush.msra.mxu0 0.0
        %260 = vmatpush.msra.mxu0 0.0
        %261 = vmatpush.msra.mxu0 0.0
        %262 = vmatpush.msra.mxu0 0.0
        %263 = vmatpush.msra.mxu0 0.0
        %264 = vmatpush.msra.mxu0 %v200
        %265 = vmatmul.f32.gmra.mxu0 %v226
        %v266 = vpop.f32.mrf.mxu0
        %v267 = vadd.f32 0.0, %v266
        %268 = vmatmul.f32.gmra.mxu0 %v229
        %v269 = vpop.f32.mrf.mxu0
        %v270 = vadd.f32 0.0, %v269
        %271 = vmatmul.f32.gmra.mxu0 %v232
        %v272 = vpop.f32.mrf.mxu0
        %v273 = vadd.f32 0.0, %v272
        %274 = vmatmul.f32.gmra.mxu0 %v235
        %v275 = vpop.f32.mrf.mxu0
        %v276 = vadd.f32 0.0, %v275
        %277 = vmatmul.f32.gmra.mxu0 %v238
        %v278 = vpop.f32.mrf.mxu0
        %v279 = vadd.f32 0.0, %v278
        %280 = vmatmul.f32.gmra.mxu0 %v241
        %v281 = vpop.f32.mrf.mxu0
        %v282 = vadd.f32 0.0, %v281
        %283 = vmatmul.f32.gmra.mxu0 %v244
        %v284 = vpop.f32.mrf.mxu0
        %v285 = vadd.f32 0.0, %v284
        %286 = vmatmul.f32.gmra.mxu0 %v247
        %v287 = vpop.f32.mrf.mxu0
        %v288 = vadd.f32 0.0, %v287
        %289 = vdwg.mxu0
        %290 = vmatpush.msra.mxu0 0.0
        %291 = vmatpush.msra.mxu0 0.0
        %292 = vmatpush.msra.mxu0 0.0
        %293 = vmatpush.msra.mxu0 0.0
        %294 = vmatpush.msra.mxu0 0.0
        %295 = vmatpush.msra.mxu0 0.0
        %296 = vmatpush.msra.mxu0 0.0
        %297 = vmatpush.msra.mxu0 0.0
        %298 = vmatpush.msra.mxu0 0.0
        %299 = vmatpush.msra.mxu0 0.0
        %300 = vmatpush.msra.mxu0 0.0
        %301 = vmatpush.msra.mxu0 0.0
        %302 = vmatpush.msra.mxu0 0.0
        %303 = vmatpush.msra.mxu0 0.0
        %304 = vmatpush.msra.mxu0 0.0
        %305 = vmatpush.msra.mxu0 %v201
        %306 = vmatmul.f32.gmra.mxu0 %v226
        %v307 = vpop.f32.mrf.mxu0
        %v308 = vadd.f32 0.0, %v307
        %309 = vmatmul.f32.gmra.mxu0 %v229
        %v310 = vpop.f32.mrf.mxu0
        %v311 = vadd.f32 0.0, %v310
        %312 = vmatmul.f32.gmra.mxu0 %v232
        %v313 = vpop.f32.mrf.mxu0
        %v314 = vadd.f32 0.0, %v313
        %315 = vmatmul.f32.gmra.mxu0 %v235
        %v316 = vpop.f32.mrf.mxu0
        %v317 = vadd.f32 0.0, %v316
        %318 = vmatmul.f32.gmra.mxu0 %v238
        %v319 = vpop.f32.mrf.mxu0
        %v320 = vadd.f32 0.0, %v319
        %321 = vmatmul.f32.gmra.mxu0 %v241
        %v322 = vpop.f32.mrf.mxu0
        %v323 = vadd.f32 0.0, %v322
        %324 = vmatmul.f32.gmra.mxu0 %v244
        %v325 = vpop.f32.mrf.mxu0
        %v326 = vadd.f32 0.0, %v325
        %327 = vmatmul.f32.gmra.mxu0 %v247
        %v328 = vpop.f32.mrf.mxu0
        %v329 = vadd.f32 0.0, %v328
        %330 = vdwg.mxu0
        %331 = vmatpush.msra.mxu0 0.0
        %332 = vmatpush.msra.mxu0 0.0
        %333 = vmatpush.msra.mxu0 0.0
        %334 = vmatpush.msra.mxu0 0.0
        %335 = vmatpush.msra.mxu0 0.0
        %336 = vmatpush.msra.mxu0 0.0
        %337 = vmatpush.msra.mxu0 0.0
        %338 = vmatpush.msra.mxu0 0.0
        %339 = vmatpush.msra.mxu0 0.0
        %340 = vmatpush.msra.mxu0 0.0
        %341 = vmatpush.msra.mxu0 0.0
        %342 = vmatpush.msra.mxu0 0.0
        %343 = vmatpush.msra.mxu0 0.0
        %344 = vmatpush.msra.mxu0 0.0
        %345 = vmatpush.msra.mxu0 0.0
        %346 = vmatpush.msra.mxu0 %v202
        %347 = vmatmul.f32.gmra.mxu0 %v226
        %v348 = vpop.f32.mrf.mxu0
        %v349 = vadd.f32 0.0, %v348
        %350 = vmatmul.f32.gmra.mxu0 %v229
        %v351 = vpop.f32.mrf.mxu0
        %v352 = vadd.f32 0.0, %v351
        %353 = vmatmul.f32.gmra.mxu0 %v232
        %v354 = vpop.f32.mrf.mxu0
        %v355 = vadd.f32 0.0, %v354
        %356 = vmatmul.f32.gmra.mxu0 %v235
        %v357 = vpop.f32.mrf.mxu0
        %v358 = vadd.f32 0.0, %v357
        %359 = vmatmul.f32.gmra.mxu0 %v238
        %v360 = vpop.f32.mrf.mxu0
        %v361 = vadd.f32 0.0, %v360
        %362 = vmatmul.f32.gmra.mxu0 %v241
        %v363 = vpop.f32.mrf.mxu0
        %v364 = vadd.f32 0.0, %v363
        %365 = vmatmul.f32.gmra.mxu0 %v244
        %v366 = vpop.f32.mrf.mxu0
        %v367 = vadd.f32 0.0, %v366
        %368 = vmatmul.f32.gmra.mxu0 %v247
        %v369 = vpop.f32.mrf.mxu0
        %v370 = vadd.f32 0.0, %v369
        %371 = vdwg.mxu0
        %372 = vmatpush.msra.mxu0 0.0
        %373 = vmatpush.msra.mxu0 0.0
        %374 = vmatpush.msra.mxu0 0.0
        %375 = vmatpush.msra.mxu0 0.0
        %376 = vmatpush.msra.mxu0 0.0
        %377 = vmatpush.msra.mxu0 0.0
        %378 = vmatpush.msra.mxu0 0.0
        %379 = vmatpush.msra.mxu0 0.0
        %380 = vmatpush.msra.mxu0 0.0
        %381 = vmatpush.msra.mxu0 0.0
        %382 = vmatpush.msra.mxu0 0.0
        %383 = vmatpush.msra.mxu0 0.0
        %384 = vmatpush.msra.mxu0 0.0
        %385 = vmatpush.msra.mxu0 0.0
        %386 = vmatpush.msra.mxu0 0.0
        %387 = vmatpush.msra.mxu0 %v203
        %388 = vmatmul.f32.gmra.mxu0 %v226
        %v389 = vpop.f32.mrf.mxu0
        %v390 = vadd.f32 0.0, %v389
        %391 = vmatmul.f32.gmra.mxu0 %v229
        %v392 = vpop.f32.mrf.mxu0
        %v393 = vadd.f32 0.0, %v392
        %394 = vmatmul.f32.gmra.mxu0 %v232
        %v395 = vpop.f32.mrf.mxu0
        %v396 = vadd.f32 0.0, %v395
        %397 = vmatmul.f32.gmra.mxu0 %v235
        %v398 = vpop.f32.mrf.mxu0
        %v399 = vadd.f32 0.0, %v398
        %400 = vmatmul.f32.gmra.mxu0 %v238
        %v401 = vpop.f32.mrf.mxu0
        %v402 = vadd.f32 0.0, %v401
        %403 = vmatmul.f32.gmra.mxu0 %v241
        %v404 = vpop.f32.mrf.mxu0
        %v405 = vadd.f32 0.0, %v404
        %406 = vmatmul.f32.gmra.mxu0 %v244
        %v407 = vpop.f32.mrf.mxu0
        %v408 = vadd.f32 0.0, %v407
        %409 = vmatmul.f32.gmra.mxu0 %v247
        %v410 = vpop.f32.mrf.mxu0
        %v411 = vadd.f32 0.0, %v410
        %412 = vdwg.mxu0
        %413 = vmatpush.msra.mxu0 0.0
        %414 = vmatpush.msra.mxu0 0.0
        %415 = vmatpush.msra.mxu0 0.0
        %416 = vmatpush.msra.mxu0 0.0
        %417 = vmatpush.msra.mxu0 0.0
        %418 = vmatpush.msra.mxu0 0.0
        %419 = vmatpush.msra.mxu0 0.0
        %420 = vmatpush.msra.mxu0 0.0
        %421 = vmatpush.msra.mxu0 0.0
        %422 = vmatpush.msra.mxu0 0.0
        %423 = vmatpush.msra.mxu0 0.0
        %424 = vmatpush.msra.mxu0 0.0
        %425 = vmatpush.msra.mxu0 0.0
        %426 = vmatpush.msra.mxu0 0.0
        %427 = vmatpush.msra.mxu0 0.0
        %428 = vmatpush.msra.mxu0 %v204
        %429 = vmatmul.f32.gmra.mxu0 %v226
        %v430 = vpop.f32.mrf.mxu0
        %v431 = vadd.f32 0.0, %v430
        %432 = vmatmul.f32.gmra.mxu0 %v229
        %v433 = vpop.f32.mrf.mxu0
        %v434 = vadd.f32 0.0, %v433
        %435 = vmatmul.f32.gmra.mxu0 %v232
        %v436 = vpop.f32.mrf.mxu0
        %v437 = vadd.f32 0.0, %v436
        %438 = vmatmul.f32.gmra.mxu0 %v235
        %v439 = vpop.f32.mrf.mxu0
        %v440 = vadd.f32 0.0, %v439
        %441 = vmatmul.f32.gmra.mxu0 %v238
        %v442 = vpop.f32.mrf.mxu0
        %v443 = vadd.f32 0.0, %v442
        %444 = vmatmul.f32.gmra.mxu0 %v241
        %v445 = vpop.f32.mrf.mxu0
        %v446 = vadd.f32 0.0, %v445
        %447 = vmatmul.f32.gmra.mxu0 %v244
        %v448 = vpop.f32.mrf.mxu0
        %v449 = vadd.f32 0.0, %v448
        %450 = vmatmul.f32.gmra.mxu0 %v247
        %v451 = vpop.f32.mrf.mxu0
        %v452 = vadd.f32 0.0, %v451
        %453 = vdwg.mxu0
        %454 = vmatpush.msra.mxu0 0.0
        %455 = vmatpush.msra.mxu0 0.0
        %456 = vmatpush.msra.mxu0 0.0
        %457 = vmatpush.msra.mxu0 0.0
        %458 = vmatpush.msra.mxu0 0.0
        %459 = vmatpush.msra.mxu0 0.0
        %460 = vmatpush.msra.mxu0 0.0
        %461 = vmatpush.msra.mxu0 0.0
        %462 = vmatpush.msra.mxu0 0.0
        %463 = vmatpush.msra.mxu0 0.0
        %464 = vmatpush.msra.mxu0 0.0
        %465 = vmatpush.msra.mxu0 0.0
        %466 = vmatpush.msra.mxu0 0.0
        %467 = vmatpush.msra.mxu0 0.0
        %468 = vmatpush.msra.mxu0 0.0
        %469 = vmatpush.msra.mxu0 %v205
        %470 = vmatmul.f32.gmra.mxu0 %v226
        %v471 = vpop.f32.mrf.mxu0
        %v472 = vadd.f32 0.0, %v471
        %473 = vmatmul.f32.gmra.mxu0 %v229
        %v474 = vpop.f32.mrf.mxu0
        %v475 = vadd.f32 0.0, %v474
        %476 = vmatmul.f32.gmra.mxu0 %v232
        %v477 = vpop.f32.mrf.mxu0
        %v478 = vadd.f32 0.0, %v477
        %479 = vmatmul.f32.gmra.mxu0 %v235
        %v480 = vpop.f32.mrf.mxu0
        %v481 = vadd.f32 0.0, %v480
        %482 = vmatmul.f32.gmra.mxu0 %v238
        %v483 = vpop.f32.mrf.mxu0
        %v484 = vadd.f32 0.0, %v483
        %485 = vmatmul.f32.gmra.mxu0 %v241
        %v486 = vpop.f32.mrf.mxu0
        %v487 = vadd.f32 0.0, %v486
        %488 = vmatmul.f32.gmra.mxu0 %v244
        %v489 = vpop.f32.mrf.mxu0
        %v490 = vadd.f32 0.0, %v489
        %491 = vmatmul.f32.gmra.mxu0 %v247
        %v492 = vpop.f32.mrf.mxu0
        %v493 = vadd.f32 0.0, %v492
        %494 = vdwg.mxu0
        %495 = vmatpush.msra.mxu0 0.0
        %496 = vmatpush.msra.mxu0 0.0
        %497 = vmatpush.msra.mxu0 0.0
        %498 = vmatpush.msra.mxu0 0.0
        %499 = vmatpush.msra.mxu0 0.0
        %500 = vmatpush.msra.mxu0 0.0
        %501 = vmatpush.msra.mxu0 0.0
        %502 = vmatpush.msra.mxu0 0.0
        %503 = vmatpush.msra.mxu0 0.0
        %504 = vmatpush.msra.mxu0 0.0
        %505 = vmatpush.msra.mxu0 0.0
        %506 = vmatpush.msra.mxu0 0.0
        %507 = vmatpush.msra.mxu0 0.0
        %508 = vmatpush.msra.mxu0 0.0
        %509 = vmatpush.msra.mxu0 0.0
        %510 = vmatpush.msra.mxu0 %v206
        %511 = vmatmul.f32.gmra.mxu0 %v226
        %v512 = vpop.f32.mrf.mxu0
        %v513 = vadd.f32 0.0, %v512
        %514 = vmatmul.f32.gmra.mxu0 %v229
        %v515 = vpop.f32.mrf.mxu0
        %v516 = vadd.f32 0.0, %v515
        %517 = vmatmul.f32.gmra.mxu0 %v232
        %v518 = vpop.f32.mrf.mxu0
        %v519 = vadd.f32 0.0, %v518
        %520 = vmatmul.f32.gmra.mxu0 %v235
        %v521 = vpop.f32.mrf.mxu0
        %v522 = vadd.f32 0.0, %v521
        %523 = vmatmul.f32.gmra.mxu0 %v238
        %v524 = vpop.f32.mrf.mxu0
        %v525 = vadd.f32 0.0, %v524
        %526 = vmatmul.f32.gmra.mxu0 %v241
        %v527 = vpop.f32.mrf.mxu0
        %v528 = vadd.f32 0.0, %v527
        %529 = vmatmul.f32.gmra.mxu0 %v244
        %v530 = vpop.f32.mrf.mxu0
        %v531 = vadd.f32 0.0, %v530
        %532 = vmatmul.f32.gmra.mxu0 %v247
        %v533 = vpop.f32.mrf.mxu0
        %v534 = vadd.f32 0.0, %v533
        %535 = vdwg.mxu0
        %536 = vmatpush.msra.mxu0 0.0
        %537 = vmatpush.msra.mxu0 0.0
        %538 = vmatpush.msra.mxu0 0.0
        %539 = vmatpush.msra.mxu0 0.0
        %540 = vmatpush.msra.mxu0 0.0
        %541 = vmatpush.msra.mxu0 0.0
        %542 = vmatpush.msra.mxu0 0.0
        %543 = vmatpush.msra.mxu0 0.0
        %544 = vmatpush.msra.mxu0 0.0
        %545 = vmatpush.msra.mxu0 0.0
        %546 = vmatpush.msra.mxu0 0.0
        %547 = vmatpush.msra.mxu0 0.0
        %548 = vmatpush.msra.mxu0 0.0
        %549 = vmatpush.msra.mxu0 0.0
        %550 = vmatpush.msra.mxu0 0.0
        %551 = vmatpush.msra.mxu0 %v207
        %552 = vmatmul.f32.gmra.mxu0 %v226
        %v553 = vpop.f32.mrf.mxu0
        %v554 = vadd.f32 0.0, %v553
        %555 = vmatmul.f32.gmra.mxu0 %v229
        %v556 = vpop.f32.mrf.mxu0
        %v557 = vadd.f32 0.0, %v556
        %558 = vmatmul.f32.gmra.mxu0 %v232
        %v559 = vpop.f32.mrf.mxu0
        %v560 = vadd.f32 0.0, %v559
        %561 = vmatmul.f32.gmra.mxu0 %v235
        %v562 = vpop.f32.mrf.mxu0
        %v563 = vadd.f32 0.0, %v562
        %564 = vmatmul.f32.gmra.mxu0 %v238
        %v565 = vpop.f32.mrf.mxu0
        %v566 = vadd.f32 0.0, %v565
        %567 = vmatmul.f32.gmra.mxu0 %v241
        %v568 = vpop.f32.mrf.mxu0
        %v569 = vadd.f32 0.0, %v568
        %570 = vmatmul.f32.gmra.mxu0 %v244
        %v571 = vpop.f32.mrf.mxu0
        %v572 = vadd.f32 0.0, %v571
        %573 = vmatmul.f32.gmra.mxu0 %v247
        %v574 = vpop.f32.mrf.mxu0
        %v575 = vadd.f32 0.0, %v574
        %576 = vdwg.mxu0
        %578 = vset.pattern.permute.xlu0 0
        %579 = vperm.xlu0 %578, %v216
        %v580 = vpop.permute.xlu0 %579
        %583 = vset.pattern.permute.xlu0 0
        %584 = vperm.xlu0 %583, %v217
        %v585 = vpop.permute.xlu0 %584
        %588 = vset.pattern.permute.xlu0 0
        %589 = vperm.xlu0 %588, %v218
        %v590 = vpop.permute.xlu0 %589
        %593 = vset.pattern.permute.xlu0 0
        %594 = vperm.xlu0 %593, %v219
        %v595 = vpop.permute.xlu0 %594
        %598 = vset.pattern.permute.xlu0 0
        %599 = vperm.xlu0 %598, %v220
        %v600 = vpop.permute.xlu0 %599
        %603 = vset.pattern.permute.xlu0 0
        %604 = vperm.xlu0 %603, %v221
        %v605 = vpop.permute.xlu0 %604
        %608 = vset.pattern.permute.xlu0 0
        %609 = vperm.xlu0 %608, %v222
        %v610 = vpop.permute.xlu0 %609
        %613 = vset.pattern.permute.xlu0 0
        %614 = vperm.xlu0 %613, %v223
        %v615 = vpop.permute.xlu0 %614
        %v617 = vadd.f32 %v580, %v267
        %v618 = vadd.f32 %v580, %v308
        %v619 = vadd.f32 %v580, %v349
        %v620 = vadd.f32 %v580, %v390
        %v621 = vadd.f32 %v580, %v431
        %v622 = vadd.f32 %v580, %v472
        %v623 = vadd.f32 %v580, %v513
        %v624 = vadd.f32 %v580, %v554
        %v625 = vadd.f32 %v585, %v270
        %v626 = vadd.f32 %v585, %v311
        %v627 = vadd.f32 %v585, %v352
        %v628 = vadd.f32 %v585, %v393
        %v629 = vadd.f32 %v585, %v434
        %v630 = vadd.f32 %v585, %v475
        %v631 = vadd.f32 %v585, %v516
        %v632 = vadd.f32 %v585, %v557
        %v633 = vadd.f32 %v590, %v273
        %v634 = vadd.f32 %v590, %v314
        %v635 = vadd.f32 %v590, %v355
        %v636 = vadd.f32 %v590, %v396
        %v637 = vadd.f32 %v590, %v437
        %v638 = vadd.f32 %v590, %v478
        %v639 = vadd.f32 %v590, %v519
        %v640 = vadd.f32 %v590, %v560
        %v641 = vadd.f32 %v595, %v276
        %v642 = vadd.f32 %v595, %v317
        %v643 = vadd.f32 %v595, %v358
        %v644 = vadd.f32 %v595, %v399
        %v645 = vadd.f32 %v595, %v440
        %v646 = vadd.f32 %v595, %v481
        %v647 = vadd.f32 %v595, %v522
        %v648 = vadd.f32 %v595, %v563
        %v649 = vadd.f32 %v600, %v279
        %v650 = vadd.f32 %v600, %v320
        %v651 = vadd.f32 %v600, %v361
        %v652 = vadd.f32 %v600, %v402
        %v653 = vadd.f32 %v600, %v443
        %v654 = vadd.f32 %v600, %v484
        %v655 = vadd.f32 %v600, %v525
        %v656 = vadd.f32 %v600, %v566
        %v657 = vadd.f32 %v605, %v282
        %v658 = vadd.f32 %v605, %v323
        %v659 = vadd.f32 %v605, %v364
        %v660 = vadd.f32 %v605, %v405
        %v661 = vadd.f32 %v605, %v446
        %v662 = vadd.f32 %v605, %v487
        %v663 = vadd.f32 %v605, %v528
        %v664 = vadd.f32 %v605, %v569
        %v665 = vadd.f32 %v610, %v285
        %v666 = vadd.f32 %v610, %v326
        %v667 = vadd.f32 %v610, %v367
        %v668 = vadd.f32 %v610, %v408
        %v669 = vadd.f32 %v610, %v449
        %v670 = vadd.f32 %v610, %v490
        %v671 = vadd.f32 %v610, %v531
        %v672 = vadd.f32 %v610, %v572
        %v673 = vadd.f32 %v615, %v288
        %v674 = vadd.f32 %v615, %v329
        %v675 = vadd.f32 %v615, %v370
        %v676 = vadd.f32 %v615, %v411
        %v677 = vadd.f32 %v615, %v452
        %v678 = vadd.f32 %v615, %v493
        %v679 = vadd.f32 %v615, %v534
        %v680 = vadd.f32 %v615, %v575
        %v681 = vmin.f32 %v617, %v625
        %v682 = vmin.f32 %v681, %v633
        %v683 = vmin.f32 %v682, %v641
        %v684 = vmin.f32 %v683, %v649
        %v685 = vmin.f32 %v684, %v657
        %v686 = vmin.f32 %v685, %v665
        %v687 = vmin.f32 %v686, %v673
        %v688 = vrot.slane %v687, 4
        %v689 = vmin.f32 %v687, %v688
        %v690 = vrot.slane %v689, 2
        %v691 = vmin.f32 %v689, %v690
        %v692 = vrot.slane %v691, 1
        %v693 = vmin.f32 %v691, %v692
        %v694 = vmin.f32 %v618, %v626
        %v695 = vmin.f32 %v694, %v634
        %v696 = vmin.f32 %v695, %v642
        %v697 = vmin.f32 %v696, %v650
        %v698 = vmin.f32 %v697, %v658
        %v699 = vmin.f32 %v698, %v666
        %v700 = vmin.f32 %v699, %v674
        %v701 = vrot.slane %v700, 4
        %v702 = vmin.f32 %v700, %v701
        %v703 = vrot.slane %v702, 2
        %v704 = vmin.f32 %v702, %v703
        %v705 = vrot.slane %v704, 1
        %v706 = vmin.f32 %v704, %v705
        %v707 = vmin.f32 %v619, %v627
        %v708 = vmin.f32 %v707, %v635
        %v709 = vmin.f32 %v708, %v643
        %v710 = vmin.f32 %v709, %v651
        %v711 = vmin.f32 %v710, %v659
        %v712 = vmin.f32 %v711, %v667
        %v713 = vmin.f32 %v712, %v675
        %v714 = vrot.slane %v713, 4
        %v715 = vmin.f32 %v713, %v714
        %v716 = vrot.slane %v715, 2
        %v717 = vmin.f32 %v715, %v716
        %v718 = vrot.slane %v717, 1
        %v719 = vmin.f32 %v717, %v718
        %v720 = vmin.f32 %v620, %v628
        %v721 = vmin.f32 %v720, %v636
        %v722 = vmin.f32 %v721, %v644
        %v723 = vmin.f32 %v722, %v652
        %v724 = vmin.f32 %v723, %v660
        %v725 = vmin.f32 %v724, %v668
        %v726 = vmin.f32 %v725, %v676
        %v727 = vrot.slane %v726, 4
        %v728 = vmin.f32 %v726, %v727
        %v729 = vrot.slane %v728, 2
        %v730 = vmin.f32 %v728, %v729
        %v731 = vrot.slane %v730, 1
        %v732 = vmin.f32 %v730, %v731
        %v733 = vmin.f32 %v621, %v629
        %v734 = vmin.f32 %v733, %v637
        %v735 = vmin.f32 %v734, %v645
        %v736 = vmin.f32 %v735, %v653
        %v737 = vmin.f32 %v736, %v661
        %v738 = vmin.f32 %v737, %v669
        %v739 = vmin.f32 %v738, %v677
        %v740 = vrot.slane %v739, 4
        %v741 = vmin.f32 %v739, %v740
        %v742 = vrot.slane %v741, 2
        %v743 = vmin.f32 %v741, %v742
        %v744 = vrot.slane %v743, 1
        %v745 = vmin.f32 %v743, %v744
        %v746 = vmin.f32 %v622, %v630
        %v747 = vmin.f32 %v746, %v638
        %v748 = vmin.f32 %v747, %v646
        %v749 = vmin.f32 %v748, %v654
        %v750 = vmin.f32 %v749, %v662
        %v751 = vmin.f32 %v750, %v670
        %v752 = vmin.f32 %v751, %v678
        %v753 = vrot.slane %v752, 4
        %v754 = vmin.f32 %v752, %v753
        %v755 = vrot.slane %v754, 2
        %v756 = vmin.f32 %v754, %v755
        %v757 = vrot.slane %v756, 1
        %v758 = vmin.f32 %v756, %v757
        %v759 = vmin.f32 %v623, %v631
        %v760 = vmin.f32 %v759, %v639
        %v761 = vmin.f32 %v760, %v647
        %v762 = vmin.f32 %v761, %v655
        %v763 = vmin.f32 %v762, %v663
        %v764 = vmin.f32 %v763, %v671
        %v765 = vmin.f32 %v764, %v679
        %v766 = vrot.slane %v765, 4
        %v767 = vmin.f32 %v765, %v766
        %v768 = vrot.slane %v767, 2
        %v769 = vmin.f32 %v767, %v768
        %v770 = vrot.slane %v769, 1
        %v771 = vmin.f32 %v769, %v770
        %v772 = vmin.f32 %v624, %v632
        %v773 = vmin.f32 %v772, %v640
        %v774 = vmin.f32 %v773, %v648
        %v775 = vmin.f32 %v774, %v656
        %v776 = vmin.f32 %v775, %v664
        %v777 = vmin.f32 %v776, %v672
        %v778 = vmin.f32 %v777, %v680
        %v779 = vrot.slane %v778, 4
        %v780 = vmin.f32 %v778, %v779
        %v781 = vrot.slane %v780, 2
        %v782 = vmin.f32 %v780, %v781
        %v783 = vrot.slane %v782, 1
        %v784 = vmin.f32 %v782, %v783
        %v785 = vlaneseq
        %v786 = vshrl.u32 %v785, 7
        %v787 = vadd.s32 %v786, 8
        %v788 = vadd.s32 %v786, 16
        %v789 = vadd.s32 %v786, 24
        %v790 = vadd.s32 %v786, 32
        %v791 = vadd.s32 %v786, 40
        %v792 = vadd.s32 %v786, 48
        %v793 = vadd.s32 %v786, 56
        %vm794 = vcmp.eq.f32.partialorder %v617, %v693
        %vm795 = vcmp.eq.f32.partialorder %v618, %v706
        %vm796 = vcmp.eq.f32.partialorder %v619, %v719
        %vm797 = vcmp.eq.f32.partialorder %v620, %v732
        %vm798 = vcmp.eq.f32.partialorder %v621, %v745
        %vm799 = vcmp.eq.f32.partialorder %v622, %v758
        %vm800 = vcmp.eq.f32.partialorder %v623, %v771
        %vm801 = vcmp.eq.f32.partialorder %v624, %v784
        %vm802 = vcmp.eq.f32.partialorder %v625, %v693
        %vm803 = vcmp.eq.f32.partialorder %v626, %v706
        %vm804 = vcmp.eq.f32.partialorder %v627, %v719
        %vm805 = vcmp.eq.f32.partialorder %v628, %v732
        %vm806 = vcmp.eq.f32.partialorder %v629, %v745
        %vm807 = vcmp.eq.f32.partialorder %v630, %v758
        %vm808 = vcmp.eq.f32.partialorder %v631, %v771
        %vm809 = vcmp.eq.f32.partialorder %v632, %v784
        %vm810 = vcmp.eq.f32.partialorder %v633, %v693
        %vm811 = vcmp.eq.f32.partialorder %v634, %v706
        %vm812 = vcmp.eq.f32.partialorder %v635, %v719
        %vm813 = vcmp.eq.f32.partialorder %v636, %v732
        %vm814 = vcmp.eq.f32.partialorder %v637, %v745
        %vm815 = vcmp.eq.f32.partialorder %v638, %v758
        %vm816 = vcmp.eq.f32.partialorder %v639, %v771
        %vm817 = vcmp.eq.f32.partialorder %v640, %v784
        %vm818 = vcmp.eq.f32.partialorder %v641, %v693
        %vm819 = vcmp.eq.f32.partialorder %v642, %v706
        %vm820 = vcmp.eq.f32.partialorder %v643, %v719
        %vm821 = vcmp.eq.f32.partialorder %v644, %v732
        %vm822 = vcmp.eq.f32.partialorder %v645, %v745
        %vm823 = vcmp.eq.f32.partialorder %v646, %v758
        %vm824 = vcmp.eq.f32.partialorder %v647, %v771
        %vm825 = vcmp.eq.f32.partialorder %v648, %v784
        %vm826 = vcmp.eq.f32.partialorder %v649, %v693
        %vm827 = vcmp.eq.f32.partialorder %v650, %v706
        %vm828 = vcmp.eq.f32.partialorder %v651, %v719
        %vm829 = vcmp.eq.f32.partialorder %v652, %v732
        %vm830 = vcmp.eq.f32.partialorder %v653, %v745
        %vm831 = vcmp.eq.f32.partialorder %v654, %v758
        %vm832 = vcmp.eq.f32.partialorder %v655, %v771
        %vm833 = vcmp.eq.f32.partialorder %v656, %v784
        %vm834 = vcmp.eq.f32.partialorder %v657, %v693
        %vm835 = vcmp.eq.f32.partialorder %v658, %v706
        %vm836 = vcmp.eq.f32.partialorder %v659, %v719
        %vm837 = vcmp.eq.f32.partialorder %v660, %v732
        %vm838 = vcmp.eq.f32.partialorder %v661, %v745
        %vm839 = vcmp.eq.f32.partialorder %v662, %v758
        %vm840 = vcmp.eq.f32.partialorder %v663, %v771
        %vm841 = vcmp.eq.f32.partialorder %v664, %v784
        %vm842 = vcmp.eq.f32.partialorder %v665, %v693
        %vm843 = vcmp.eq.f32.partialorder %v666, %v706
        %vm844 = vcmp.eq.f32.partialorder %v667, %v719
        %vm845 = vcmp.eq.f32.partialorder %v668, %v732
        %vm846 = vcmp.eq.f32.partialorder %v669, %v745
        %vm847 = vcmp.eq.f32.partialorder %v670, %v758
        %vm848 = vcmp.eq.f32.partialorder %v671, %v771
        %vm849 = vcmp.eq.f32.partialorder %v672, %v784
        %vm850 = vcmp.eq.f32.partialorder %v673, %v693
        %vm851 = vcmp.eq.f32.partialorder %v674, %v706
        %vm852 = vcmp.eq.f32.partialorder %v675, %v719
        %vm853 = vcmp.eq.f32.partialorder %v676, %v732
        %vm854 = vcmp.eq.f32.partialorder %v677, %v745
        %vm855 = vcmp.eq.f32.partialorder %v678, %v758
        %vm856 = vcmp.eq.f32.partialorder %v679, %v771
        %vm857 = vcmp.eq.f32.partialorder %v680, %v784
        %v858 = vsel %vm794, %v786, 64
        %v859 = vsel %vm795, %v786, 64
        %v860 = vsel %vm796, %v786, 64
        %v861 = vsel %vm797, %v786, 64
        %v862 = vsel %vm798, %v786, 64
        %v863 = vsel %vm799, %v786, 64
        %v864 = vsel %vm800, %v786, 64
        %v865 = vsel %vm801, %v786, 64
        %v866 = vsel %vm802, %v787, 64
        %v867 = vsel %vm803, %v787, 64
        %v868 = vsel %vm804, %v787, 64
        %v869 = vsel %vm805, %v787, 64
        %v870 = vsel %vm806, %v787, 64
        %v871 = vsel %vm807, %v787, 64
        %v872 = vsel %vm808, %v787, 64
        %v873 = vsel %vm809, %v787, 64
        %v874 = vsel %vm810, %v788, 64
        %v875 = vsel %vm811, %v788, 64
        %v876 = vsel %vm812, %v788, 64
        %v877 = vsel %vm813, %v788, 64
        %v878 = vsel %vm814, %v788, 64
        %v879 = vsel %vm815, %v788, 64
        %v880 = vsel %vm816, %v788, 64
        %v881 = vsel %vm817, %v788, 64
        %v882 = vsel %vm818, %v789, 64
        %v883 = vsel %vm819, %v789, 64
        %v884 = vsel %vm820, %v789, 64
        %v885 = vsel %vm821, %v789, 64
        %v886 = vsel %vm822, %v789, 64
        %v887 = vsel %vm823, %v789, 64
        %v888 = vsel %vm824, %v789, 64
        %v889 = vsel %vm825, %v789, 64
        %v890 = vsel %vm826, %v790, 64
        %v891 = vsel %vm827, %v790, 64
        %v892 = vsel %vm828, %v790, 64
        %v893 = vsel %vm829, %v790, 64
        %v894 = vsel %vm830, %v790, 64
        %v895 = vsel %vm831, %v790, 64
        %v896 = vsel %vm832, %v790, 64
        %v897 = vsel %vm833, %v790, 64
        %v898 = vsel %vm834, %v791, 64
        %v899 = vsel %vm835, %v791, 64
        %v900 = vsel %vm836, %v791, 64
        %v901 = vsel %vm837, %v791, 64
        %v902 = vsel %vm838, %v791, 64
        %v903 = vsel %vm839, %v791, 64
        %v904 = vsel %vm840, %v791, 64
        %v905 = vsel %vm841, %v791, 64
        %v906 = vsel %vm842, %v792, 64
        %v907 = vsel %vm843, %v792, 64
        %v908 = vsel %vm844, %v792, 64
        %v909 = vsel %vm845, %v792, 64
        %v910 = vsel %vm846, %v792, 64
        %v911 = vsel %vm847, %v792, 64
        %v912 = vsel %vm848, %v792, 64
        %v913 = vsel %vm849, %v792, 64
        %v914 = vsel %vm850, %v793, 64
        %v915 = vsel %vm851, %v793, 64
        %v916 = vsel %vm852, %v793, 64
        %v917 = vsel %vm853, %v793, 64
        %v918 = vsel %vm854, %v793, 64
        %v919 = vsel %vm855, %v793, 64
        %v920 = vsel %vm856, %v793, 64
        %v921 = vsel %vm857, %v793, 64
        %vm922 = vcmp.lt.s32.totalorder %v858, %v866
        %v923 = vsel %vm922, %v858, %v866
        %vm924 = vcmp.lt.s32.totalorder %v923, %v874
        %v925 = vsel %vm924, %v923, %v874
        %vm926 = vcmp.lt.s32.totalorder %v925, %v882
        %v927 = vsel %vm926, %v925, %v882
        %vm928 = vcmp.lt.s32.totalorder %v927, %v890
        %v929 = vsel %vm928, %v927, %v890
        %vm930 = vcmp.lt.s32.totalorder %v929, %v898
        %v931 = vsel %vm930, %v929, %v898
        %vm932 = vcmp.lt.s32.totalorder %v931, %v906
        %v933 = vsel %vm932, %v931, %v906
        %vm934 = vcmp.lt.s32.totalorder %v933, %v914
        %v935 = vsel %vm934, %v933, %v914
        %v936 = vrot.slane %v935, 4
        %vm937 = vcmp.lt.s32.totalorder %v935, %v936
        %v938 = vsel %vm937, %v935, %v936
        %v939 = vrot.slane %v938, 2
        %vm940 = vcmp.lt.s32.totalorder %v938, %v939
        %v941 = vsel %vm940, %v938, %v939
        %v942 = vrot.slane %v941, 1
        %vm943 = vcmp.lt.s32.totalorder %v941, %v942
        %v944 = vsel %vm943, %v941, %v942
        %vm945 = vcmp.lt.s32.totalorder %v859, %v867
        %v946 = vsel %vm945, %v859, %v867
        %vm947 = vcmp.lt.s32.totalorder %v946, %v875
        %v948 = vsel %vm947, %v946, %v875
        %vm949 = vcmp.lt.s32.totalorder %v948, %v883
        %v950 = vsel %vm949, %v948, %v883
        %vm951 = vcmp.lt.s32.totalorder %v950, %v891
        %v952 = vsel %vm951, %v950, %v891
        %vm953 = vcmp.lt.s32.totalorder %v952, %v899
        %v954 = vsel %vm953, %v952, %v899
        %vm955 = vcmp.lt.s32.totalorder %v954, %v907
        %v956 = vsel %vm955, %v954, %v907
        %vm957 = vcmp.lt.s32.totalorder %v956, %v915
        %v958 = vsel %vm957, %v956, %v915
        %v959 = vrot.slane %v958, 4
        %vm960 = vcmp.lt.s32.totalorder %v958, %v959
        %v961 = vsel %vm960, %v958, %v959
        %v962 = vrot.slane %v961, 2
        %vm963 = vcmp.lt.s32.totalorder %v961, %v962
        %v964 = vsel %vm963, %v961, %v962
        %v965 = vrot.slane %v964, 1
        %vm966 = vcmp.lt.s32.totalorder %v964, %v965
        %v967 = vsel %vm966, %v964, %v965
        %vm968 = vcmp.lt.s32.totalorder %v860, %v868
        %v969 = vsel %vm968, %v860, %v868
        %vm970 = vcmp.lt.s32.totalorder %v969, %v876
        %v971 = vsel %vm970, %v969, %v876
        %vm972 = vcmp.lt.s32.totalorder %v971, %v884
        %v973 = vsel %vm972, %v971, %v884
        %vm974 = vcmp.lt.s32.totalorder %v973, %v892
        %v975 = vsel %vm974, %v973, %v892
        %vm976 = vcmp.lt.s32.totalorder %v975, %v900
        %v977 = vsel %vm976, %v975, %v900
        %vm978 = vcmp.lt.s32.totalorder %v977, %v908
        %v979 = vsel %vm978, %v977, %v908
        %vm980 = vcmp.lt.s32.totalorder %v979, %v916
        %v981 = vsel %vm980, %v979, %v916
        %v982 = vrot.slane %v981, 4
        %vm983 = vcmp.lt.s32.totalorder %v981, %v982
        %v984 = vsel %vm983, %v981, %v982
        %v985 = vrot.slane %v984, 2
        %vm986 = vcmp.lt.s32.totalorder %v984, %v985
        %v987 = vsel %vm986, %v984, %v985
        %v988 = vrot.slane %v987, 1
        %vm989 = vcmp.lt.s32.totalorder %v987, %v988
        %v990 = vsel %vm989, %v987, %v988
        %vm991 = vcmp.lt.s32.totalorder %v861, %v869
        %v992 = vsel %vm991, %v861, %v869
        %vm993 = vcmp.lt.s32.totalorder %v992, %v877
        %v994 = vsel %vm993, %v992, %v877
        %vm995 = vcmp.lt.s32.totalorder %v994, %v885
        %v996 = vsel %vm995, %v994, %v885
        %vm997 = vcmp.lt.s32.totalorder %v996, %v893
        %v998 = vsel %vm997, %v996, %v893
        %vm999 = vcmp.lt.s32.totalorder %v998, %v901
        %v1000 = vsel %vm999, %v998, %v901
        %vm1001 = vcmp.lt.s32.totalorder %v1000, %v909
        %v1002 = vsel %vm1001, %v1000, %v909
        %vm1003 = vcmp.lt.s32.totalorder %v1002, %v917
        %v1004 = vsel %vm1003, %v1002, %v917
        %v1005 = vrot.slane %v1004, 4
        %vm1006 = vcmp.lt.s32.totalorder %v1004, %v1005
        %v1007 = vsel %vm1006, %v1004, %v1005
        %v1008 = vrot.slane %v1007, 2
        %vm1009 = vcmp.lt.s32.totalorder %v1007, %v1008
        %v1010 = vsel %vm1009, %v1007, %v1008
        %v1011 = vrot.slane %v1010, 1
        %vm1012 = vcmp.lt.s32.totalorder %v1010, %v1011
        %v1013 = vsel %vm1012, %v1010, %v1011
        %vm1014 = vcmp.lt.s32.totalorder %v862, %v870
        %v1015 = vsel %vm1014, %v862, %v870
        %vm1016 = vcmp.lt.s32.totalorder %v1015, %v878
        %v1017 = vsel %vm1016, %v1015, %v878
        %vm1018 = vcmp.lt.s32.totalorder %v1017, %v886
        %v1019 = vsel %vm1018, %v1017, %v886
        %vm1020 = vcmp.lt.s32.totalorder %v1019, %v894
        %v1021 = vsel %vm1020, %v1019, %v894
        %vm1022 = vcmp.lt.s32.totalorder %v1021, %v902
        %v1023 = vsel %vm1022, %v1021, %v902
        %vm1024 = vcmp.lt.s32.totalorder %v1023, %v910
        %v1025 = vsel %vm1024, %v1023, %v910
        %vm1026 = vcmp.lt.s32.totalorder %v1025, %v918
        %v1027 = vsel %vm1026, %v1025, %v918
        %v1028 = vrot.slane %v1027, 4
        %vm1029 = vcmp.lt.s32.totalorder %v1027, %v1028
        %v1030 = vsel %vm1029, %v1027, %v1028
        %v1031 = vrot.slane %v1030, 2
        %vm1032 = vcmp.lt.s32.totalorder %v1030, %v1031
        %v1033 = vsel %vm1032, %v1030, %v1031
        %v1034 = vrot.slane %v1033, 1
        %vm1035 = vcmp.lt.s32.totalorder %v1033, %v1034
        %v1036 = vsel %vm1035, %v1033, %v1034
        %vm1037 = vcmp.lt.s32.totalorder %v863, %v871
        %v1038 = vsel %vm1037, %v863, %v871
        %vm1039 = vcmp.lt.s32.totalorder %v1038, %v879
        %v1040 = vsel %vm1039, %v1038, %v879
        %vm1041 = vcmp.lt.s32.totalorder %v1040, %v887
        %v1042 = vsel %vm1041, %v1040, %v887
        %vm1043 = vcmp.lt.s32.totalorder %v1042, %v895
        %v1044 = vsel %vm1043, %v1042, %v895
        %vm1045 = vcmp.lt.s32.totalorder %v1044, %v903
        %v1046 = vsel %vm1045, %v1044, %v903
        %vm1047 = vcmp.lt.s32.totalorder %v1046, %v911
        %v1048 = vsel %vm1047, %v1046, %v911
        %vm1049 = vcmp.lt.s32.totalorder %v1048, %v919
        %v1050 = vsel %vm1049, %v1048, %v919
        %v1051 = vrot.slane %v1050, 4
        %vm1052 = vcmp.lt.s32.totalorder %v1050, %v1051
        %v1053 = vsel %vm1052, %v1050, %v1051
        %v1054 = vrot.slane %v1053, 2
        %vm1055 = vcmp.lt.s32.totalorder %v1053, %v1054
        %v1056 = vsel %vm1055, %v1053, %v1054
        %v1057 = vrot.slane %v1056, 1
        %vm1058 = vcmp.lt.s32.totalorder %v1056, %v1057
        %v1059 = vsel %vm1058, %v1056, %v1057
        %vm1060 = vcmp.lt.s32.totalorder %v864, %v872
        %v1061 = vsel %vm1060, %v864, %v872
        %vm1062 = vcmp.lt.s32.totalorder %v1061, %v880
        %v1063 = vsel %vm1062, %v1061, %v880
        %vm1064 = vcmp.lt.s32.totalorder %v1063, %v888
        %v1065 = vsel %vm1064, %v1063, %v888
        %vm1066 = vcmp.lt.s32.totalorder %v1065, %v896
        %v1067 = vsel %vm1066, %v1065, %v896
        %vm1068 = vcmp.lt.s32.totalorder %v1067, %v904
        %v1069 = vsel %vm1068, %v1067, %v904
        %vm1070 = vcmp.lt.s32.totalorder %v1069, %v912
        %v1071 = vsel %vm1070, %v1069, %v912
        %vm1072 = vcmp.lt.s32.totalorder %v1071, %v920
        %v1073 = vsel %vm1072, %v1071, %v920
        %v1074 = vrot.slane %v1073, 4
        %vm1075 = vcmp.lt.s32.totalorder %v1073, %v1074
        %v1076 = vsel %vm1075, %v1073, %v1074
        %v1077 = vrot.slane %v1076, 2
        %vm1078 = vcmp.lt.s32.totalorder %v1076, %v1077
        %v1079 = vsel %vm1078, %v1076, %v1077
        %v1080 = vrot.slane %v1079, 1
        %vm1081 = vcmp.lt.s32.totalorder %v1079, %v1080
        %v1082 = vsel %vm1081, %v1079, %v1080
        %vm1083 = vcmp.lt.s32.totalorder %v865, %v873
        %v1084 = vsel %vm1083, %v865, %v873
        %vm1085 = vcmp.lt.s32.totalorder %v1084, %v881
        %v1086 = vsel %vm1085, %v1084, %v881
        %vm1087 = vcmp.lt.s32.totalorder %v1086, %v889
        %v1088 = vsel %vm1087, %v1086, %v889
        %vm1089 = vcmp.lt.s32.totalorder %v1088, %v897
        %v1090 = vsel %vm1089, %v1088, %v897
        %vm1091 = vcmp.lt.s32.totalorder %v1090, %v905
        %v1092 = vsel %vm1091, %v1090, %v905
        %vm1093 = vcmp.lt.s32.totalorder %v1092, %v913
        %v1094 = vsel %vm1093, %v1092, %v913
        %vm1095 = vcmp.lt.s32.totalorder %v1094, %v921
        %v1096 = vsel %vm1095, %v1094, %v921
        %v1097 = vrot.slane %v1096, 4
        %vm1098 = vcmp.lt.s32.totalorder %v1096, %v1097
        %v1099 = vsel %vm1098, %v1096, %v1097
        %v1100 = vrot.slane %v1099, 2
        %vm1101 = vcmp.lt.s32.totalorder %v1099, %v1100
        %v1102 = vsel %vm1101, %v1099, %v1100
        %v1103 = vrot.slane %v1102, 1
        %vm1104 = vcmp.lt.s32.totalorder %v1102, %v1103
        %v1105 = vsel %vm1104, %v1102, %v1103
        %vm1106 = vcmp.lt.f32.partialorder %v693, inf
        %vm1107 = vcmp.lt.f32.partialorder %v706, inf
        %vm1108 = vcmp.lt.f32.partialorder %v719, inf
        %vm1109 = vcmp.lt.f32.partialorder %v732, inf
        %vm1110 = vcmp.lt.f32.partialorder %v745, inf
        %vm1111 = vcmp.lt.f32.partialorder %v758, inf
        %vm1112 = vcmp.lt.f32.partialorder %v771, inf
        %vm1113 = vcmp.lt.f32.partialorder %v784, inf
        %v1114 = vsel %vm1106, %v944, 0
        %v1115 = vsel %vm1107, %v967, 0
        %v1116 = vsel %vm1108, %v990, 0
        %v1117 = vsel %vm1109, %v1013, 0
        %v1118 = vsel %vm1110, %v1036, 0
        %v1119 = vsel %vm1111, %v1059, 0
        %v1120 = vsel %vm1112, %v1082, 0
        %v1121 = vsel %vm1113, %v1105, 0
        %v1122 = vrot.slane %v1115, 7
        %v1123 = vrot.slane %v1116, 6
        %v1124 = vrot.slane %v1117, 5
        %v1125 = vrot.slane %v1118, 4
        %v1126 = vrot.slane %v1119, 3
        %v1127 = vrot.slane %v1120, 2
        %v1128 = vrot.slane %v1121, 1
        %vm1129 = vcmask 1040384
        %v1130 = vsel %vm1129, %v1114, %v1122
        %vm1131 = vcmask 1042434
        %v1132 = vsel %vm1131, %v1123, %v1124
        %vm1133 = vcmask 1041408
        %v1134 = vsel %vm1133, %v1130, %v1132
        %vm1135 = vcmask 1044484
        %v1136 = vsel %vm1135, %v1125, %v1126
        %vm1137 = vcmask 1046534
        %v1138 = vsel %vm1137, %v1127, %v1128
        %vm1139 = vcmask 1045508
        %v1140 = vsel %vm1139, %v1136, %v1138
        %vm1141 = vcmask 1043456
        %v1142 = vsel %vm1141, %v1134, %v1140
        %1143 = vst [vmem:[%s188] sm:$0xff] %v1142
        %s1144 = sand.u32 %s109, 1
        %s1145 = scalar_lea.sflag [#allocation3], %s1144
        %s1146 = sand.u32 %s109, 1
        %s1147 = smul.addr %s1146, 8
        %s1148 = scalar_lea.vmem [#allocation2], %s1147
        // Predicated region
        $region33: #{tpu_custom_call.1} parent=31 // pred_check
          %p1149 = pneg %p119
        $region34: #{tpu_custom_call.1} parent=31 // pred_check_branch
          %1151 = sbr.rel (%p1149) target = $region36
        $region35: #{tpu_custom_call.1} parent=31 // pred_region
          %s1152 = smul.u32 8, %s22
          %1154 = vsyncadd %s1145, 0
          %s1155 = smul.addr %s21, 8
          %s1156 = sadd.s32 %s1152, %s1155
          %s1157 = scalar_lea.hbm %s3, %s1156
          %s1159 = sshll.u32 %s1148, 4
          %s1160 = int_to_ptr.vmem [resolvable:$true] %s1159
          %s1161 = sshll.u32 %s1157, 4
          %s1162 = int_to_ptr.hbm [resolvable:$true] %s1161
          %1164 = dma.vmem_to_hbm [thread:$0]  %s1160, 128, %s1162, %s1145
        $region36: #{tpu_custom_call.1} parent=31 // pred_fallthru
          _
      $region32: #{tpu_custom_call.1} parent=5 // pred_fallthru
        _
      %p1165 = scmp.le.s32.totalorder 2, %s12
      // Predicated region
      $region37: #{tpu_custom_call.1} parent=5 // pred_check
        %p1166 = pneg %p1165
      $region38: #{tpu_custom_call.1} parent=5 // pred_check_branch
        %1168 = sbr.rel (%p1166) target = $region40
      $region39: #{tpu_custom_call.1} parent=5 // pred_region
        %s1169 = ssub.s32 %s12, 2
        // Predicated region
        $region41: #{tpu_custom_call.1} parent=39 // pred_check
          %p1170 = pneg %p125
        $region42: #{tpu_custom_call.1} parent=39 // pred_check_branch
          %1172 = sbr.rel (%p1170) target = $region44
        $region43: #{tpu_custom_call.1} parent=39 // pred_region
          %s1173 = sand.u32 %s110, 1
          %s1174 = scalar_lea.sflag [#allocation3], %s1173
          %s1175 = sand.u32 %s110, 1
          %s1176 = smul.addr %s1175, 8
          %s1177 = scalar_lea.vmem [#allocation2], %s1176
          %1179 = dma.done %s1174, 128
        $region44: #{tpu_custom_call.1} parent=39 // pred_fallthru
          _
      $region40: #{tpu_custom_call.1} parent=5 // pred_fallthru
        _
    $region6: #{tpu_custom_call.1} parent=1 // loop_footer
      %s16 = sadd.s32 1, %s12
    $region7: #{tpu_custom_call.1} parent=1 // loop_footer_branch
      %11 = sbr.rel target = $region3
    $region8: #{tpu_custom_call.1} parent=1 // loop_exit
      _
    %1180 = vsyncpa [#allocation3], 1
    %s1181 = scalar_lea.sflag [#allocation3], 1
    %1182 = vsyncpa %s1181, 1

// kernel: tpu_custom_call.1
$region0: #{tpu_custom_call.1}
  #allocation0 [shape = 'u32[]', space=smem, size = 0x4, offset = 0x4, fixed_abs, tag = 'smem constant byte address 0x4 - core index']
  #allocation1 [shape = 'u32[72,128]{1,0:T(1,128)}', space=vmem, size = 0x9000, scoped, tag = 'internal scratch']
  %s0 = inlined_call_operand.vmem [shape: f32[1,64,1], index: 0, kind: input, shape index: {}]
  %s1 = inlined_call_operand.vmem [shape: f32[1,64,8], index: 1, kind: input, shape index: {}]
  %s2 = inlined_call_operand.vmem [shape: f32[2,8,1024], index: 2, kind: input, shape index: {}]
  %s3 = inlined_call_operand.hbm [shape: s32[2,1,1024], index: 3, kind: output, shape index: {}]
  %s4 = sld [smem:[#allocation0]]
  $region45: #{tpu_custom_call.1} parent=0
    _
  %s6 = ssub.s32 1, %s4
  %s7 = scalar_select 0, %s6, %s4
  $region1: #{tpu_custom_call.1} parent=0
    #allocation2 [shape = 'u8[8192]{0}', space=vmem, size = 0x2000, scoped, tag = 'output window, operand 0']
    #allocation3 [shape = 's32[2]{0}', space=sflag, size = 0x8, scoped, tag = 'scoped memory for tpu_custom_call.1']
    %8 = vsyncpa [#allocation3], 0
    %s9 = scalar_lea.sflag [#allocation3], 1
    %10 = vsyncpa %s9, 0
    loop: start=0, step=1, limit=4
    $region2: #{tpu_custom_call.1} parent=1 // loop_pre_header
      _
    $region3: #{tpu_custom_call.1} parent=1 // loop_header
      %s12 = sphi 0, %s16
      %p13 = scmp.ge.s32.totalorder %s12, 4
      %s19 = sphi 0, %s31
      %s20 = sphi 0, %s27
      %s21 = sphi 0, %s19
      %s22 = sphi 0, %s20
      %s23 = sphi 0, %s21
      %s24 = sphi 0, %s22
      %s32 = sphi 0, %s32
      %s34 = sphi 0, %s32
      %s35 = sphi 0, %s34
      %s49 = sphi 0, %s35
      %s53 = sphi 0, %s53
      %s55 = sphi 0, %s53
      %s56 = sphi 0, %s55
      %s70 = sphi 0, %s56
      %s78 = sphi 0, %s80
      %s81 = sphi 0, %s78
      %s82 = sphi 0, %s81
      %s98 = sphi 0, %s82
      %s106 = sphi 0, %s108
      %s109 = sphi 0, %s106
      %s110 = sphi 0, %s109
      %s126 = sphi 0, %s110
    $region4: #{tpu_custom_call.1} parent=1 // loop_header_branch
      %15 = sbr.rel (%p13) target = $region8
    $region5: #{tpu_custom_call.1} parent=1 // loop_body
      %s17 = ssub.s32 %s12, 1
      %s18 = ssub.s32 %s12, 2
      %s25 = sadd.s32 1, %s20
      %p26 = scmp.ge.s32.totalorder %s25, 1
      %s27 = scalar_select %p26, 0, %s25
      %s28 = sadd.s32 1, %s19
      %s29 = scalar_select %p26, %s28, %s19
      %p30 = scmp.ge.s32.totalorder %s29, 2
      %s31 = scalar_select %p30, 0, %s29
      %s33 = sadd.s32 %s32, 1
      %p36 = scmp.eq.s32.totalorder %s12, 1
      %p37 = scmp.ne.s32.totalorder %s32, %s34
      %p38 = scmp.eq.s32.totalorder %s12, 0
      %p39 = por %p37, %p38
      %p40 = scmp.ne.s32.totalorder %s32, %s34
      %p41 = scmp.eq.s32.totalorder %s17, 1
      %p42 = por %p40, %p41
      %p43 = scmp.ne.s32.totalorder %s34, %s35
      %p44 = scmp.eq.s32.totalorder %s17, 0
      %p45 = por %p43, %p44
      %p46 = scmp.ne.s32.totalorder %s34, %s35
      %p47 = scmp.eq.s32.totalorder %s18, 1
      %p48 = por %p46, %p47
      %p50 = scmp.ne.s32.totalorder %s35, %s49
      %p51 = scmp.eq.s32.totalorder %s18, 0
      %p52 = por %p50, %p51
      %s54 = sadd.s32 %s53, 1
      %p57 = scmp.eq.s32.totalorder %s12, 1
      %p58 = scmp.ne.s32.totalorder %s53, %s55
      %p59 = scmp.eq.s32.totalorder %s12, 0
      %p60 = por %p58, %p59
      %p61 = scmp.ne.s32.totalorder %s53, %s55
      %p62 = scmp.eq.s32.totalorder %s17, 1
      %p63 = por %p61, %p62
      %p64 = scmp.ne.s32.totalorder %s55, %s56
      %p65 = scmp.eq.s32.totalorder %s17, 0
      %p66 = por %p64, %p65
      %p67 = scmp.ne.s32.totalorder %s55, %s56
      %p68 = scmp.eq.s32.totalorder %s18, 1
      %p69 = por %p67, %p68
      %p71 = scmp.ne.s32.totalorder %s56, %s70
      %p72 = scmp.eq.s32.totalorder %s18, 0
      %p73 = por %p71, %p72
      %s74 = ssub.s32 %s19, %s31
      %s75 = ssub.s32 %s20, %s27
      %s76 = sor.u32 %s74, %s75
      %p77 = scmp.eq.s32.totalorder %s76, 0
      %s79 = sadd.s32 %s78, 1
      %s80 = scalar_select %p77, %s78, %s79
      %p83 = pneg %p77
      %p84 = scmp.eq.s32.totalorder %s12, 1
      %p85 = por %p83, %p84
      %p86 = scmp.ne.s32.totalorder %s78, %s81
      %p87 = scmp.eq.s32.totalorder %s12, 0
      %p88 = por %p86, %p87
      %p89 = scmp.ne.s32.totalorder %s78, %s81
      %p90 = scmp.eq.s32.totalorder %s17, 1
      %p91 = por %p89, %p90
      %p92 = scmp.ne.s32.totalorder %s81, %s82
      %p93 = scmp.eq.s32.totalorder %s17, 0
      %p94 = por %p92, %p93
      %p95 = scmp.ne.s32.totalorder %s81, %s82
      %p96 = scmp.eq.s32.totalorder %s18, 1
      %p97 = por %p95, %p96
      %p99 = scmp.ne.s32.totalorder %s82, %s98
      %p100 = scmp.eq.s32.totalorder %s18, 0
      %p101 = por %p99, %p100
      %s102 = ssub.s32 %s19, %s31
      %s103 = ssub.s32 %s20, %s27
      %s104 = sor.u32 %s102, %s103
      %p105 = scmp.eq.s32.totalorder %s104, 0
      %s107 = sadd.s32 %s106, 1
      %s108 = scalar_select %p105, %s106, %s107
      %p111 = pneg %p105
      %p112 = scmp.eq.s32.totalorder %s12, 1
      %p113 = por %p111, %p112
      %p114 = scmp.ne.s32.totalorder %s106, %s109
      %p115 = scmp.eq.s32.totalorder %s12, 0
      %p116 = por %p114, %p115
      %p117 = scmp.ne.s32.totalorder %s106, %s109
      %p118 = scmp.eq.s32.totalorder %s17, 1
      %p119 = por %p117, %p118
      %p120 = scmp.ne.s32.totalorder %s109, %s110
      %p121 = scmp.eq.s32.totalorder %s17, 0
      %p122 = por %p120, %p121
      %p123 = scmp.ne.s32.totalorder %s109, %s110
      %p124 = scmp.eq.s32.totalorder %s18, 1
      %p125 = por %p123, %p124
      %p127 = scmp.ne.s32.totalorder %s110, %s126
      %p128 = scmp.eq.s32.totalorder %s18, 0
      %p129 = por %p127, %p128
      %p130 = scmp.le.s32.totalorder 1, %s12
      %p131 = scmp.lt.s32.totalorder %s12, 3
      %p132 = pnand %p130, %p131
      %p133 = pneg %p132
      // Predicated region
      $region9: #{tpu_custom_call.1} parent=5 // pred_check
        _
      $region10: #{tpu_custom_call.1} parent=5 // pred_check_branch
        %135 = sbr.rel (%p132) target = $region12
      $region11: #{tpu_custom_call.1} parent=5 // pred_region
        %s136 = ssub.s32 %s12, 1
        // Predicated region
        $region13: #{tpu_custom_call.1} parent=11 // pred_check
          %p137 = pneg %p45
        $region14: #{tpu_custom_call.1} parent=11 // pred_check_branch
          %139 = sbr.rel (%p137) target = $region16
        $region15: #{tpu_custom_call.1} parent=11 // pred_region
          _
        $region16: #{tpu_custom_call.1} parent=11 // pred_fallthru
          _
        // Predicated region
        $region17: #{tpu_custom_call.1} parent=11 // pred_check
          %p140 = pneg %p66
        $region18: #{tpu_custom_call.1} parent=11 // pred_check_branch
          %142 = sbr.rel (%p140) target = $region20
        $region19: #{tpu_custom_call.1} parent=11 // pred_region
          _
        $region20: #{tpu_custom_call.1} parent=11 // pred_fallthru
          _
      $region12: #{tpu_custom_call.1} parent=5 // pred_fallthru
        _
      %p143 = scmp.lt.s32.totalorder %s12, 2
      // Predicated region
      $region21: #{tpu_custom_call.1} parent=5 // pred_check
        %p144 = pneg %p143
      $region22: #{tpu_custom_call.1} parent=5 // pred_check_branch
        %146 = sbr.rel (%p144) target = $region24
      $region23: #{tpu_custom_call.1} parent=5 // pred_region
        // Predicated region
        $region25: #{tpu_custom_call.1} parent=23 // pred_check
          %p147 = pneg %p88
        $region26: #{tpu_custom_call.1} parent=23 // pred_check_branch
          %149 = sbr.rel (%p147) target = $region28
        $region27: #{tpu_custom_call.1} parent=23 // pred_region
          %s150 = smul.u32 8, %s20
          %p151 = scmp.lt.s32.totalorder %s19, 1
          %s152 = scalar_select %p151, %s19, 1
          %p153 = scmp.lt.s32.totalorder %s150, 7
          %s154 = scalar_select %p153, %s150, 7
          %s155 = smul.addr %s152, 8
          %s156 = sadd.s32 %s154, %s155
          %s157 = smul.addr %s156, 8
          %s158 = scalar_lea.vmem %s2, %s157
          %s159 = smul.u32 8, %s20
        $region28: #{tpu_custom_call.1} parent=23 // pred_fallthru
          _
      $region24: #{tpu_custom_call.1} parent=5 // pred_fallthru
        _
      %p160 = scmp.le.s32.totalorder 1, %s12
      %p161 = scmp.lt.s32.totalorder %s12, 3
      %p162 = pnand %p160, %p161
      %p163 = pneg %p162
      // Predicated region
      $region29: #{tpu_custom_call.1} parent=5 // pred_check
        _
      $region30: #{tpu_custom_call.1} parent=5 // pred_check_branch
        %165 = sbr.rel (%p162) target = $region32
      $region31: #{tpu_custom_call.1} parent=5 // pred_region
        %s166 = ssub.s32 %s12, 1
        %p167 = pneg %p45
        %p168 = pneg %p42
        %p169 = pneg %p66
        %p170 = pneg %p63
        %s171 = smul.u32 8, %s22
        %p172 = scmp.lt.s32.totalorder %s21, 1
        %s173 = scalar_select %p172, %s21, 1
        %p174 = scmp.lt.s32.totalorder %s171, 7
        %s175 = scalar_select %p174, %s171, 7
        %s176 = smul.addr %s173, 8
        %s177 = sadd.s32 %s175, %s176
        %s178 = smul.addr %s177, 8
        %s179 = scalar_lea.vmem %s2, %s178
        %p180 = pneg %p94
        %p181 = pneg %p91
        %p182 = pneg %p122
        %p183 = pneg %p119
        %s184 = sand.u32 %s109, 1
        %s185 = scalar_lea.sflag [#allocation3], %s184
        %s186 = sand.u32 %s109, 1
        %s187 = smul.addr %s186, 8
        %s188 = scalar_lea.vmem [#allocation2], %s187
        %s189 = smul.u32 8, %s22
        %p190 = scmp.lt.s32.totalorder %s21, 1
        %s191 = scalar_select %p190, %s21, 1
        %p192 = scmp.lt.s32.totalorder %s189, 7
        %s193 = scalar_select %p192, %s189, 7
        %s194 = smul.addr %s191, 8
        %s195 = sadd.s32 %s193, %s194
        %s196 = smul.addr %s195, 8
        %s197 = scalar_lea.vmem %s2, %s196
        %s198 = smul.u32 8, %s22
        %s199 = smul.u32 8, %s22
        %v200 = vld [vmem:[%s197] sm:$0xff]
        %v201 = vld [vmem:[%s197 + $0x8] sm:$0xff]
        %v202 = vld [vmem:[%s197 + $0x10] sm:$0xff]
        %v203 = vld [vmem:[%s197 + $0x18] sm:$0xff]
        %v204 = vld [vmem:[%s197 + $0x20] sm:$0xff]
        %v205 = vld [vmem:[%s197 + $0x28] sm:$0xff]
        %v206 = vld [vmem:[%s197 + $0x30] sm:$0xff]
        %v207 = vld [vmem:[%s197 + $0x38] sm:$0xff]
        %v208 = vld [vmem:[%s1] sm:$0xff]
        %v209 = vld [vmem:[%s1 + $0x8] sm:$0xff]
        %v210 = vld [vmem:[%s1 + $0x10] sm:$0xff]
        %v211 = vld [vmem:[%s1 + $0x18] sm:$0xff]
        %v212 = vld [vmem:[%s1 + $0x20] sm:$0xff]
        %v213 = vld [vmem:[%s1 + $0x28] sm:$0xff]
        %v214 = vld [vmem:[%s1 + $0x30] sm:$0xff]
        %v215 = vld [vmem:[%s1 + $0x38] sm:$0xff]
        %v216 = vld [vmem:[%s0] sm:$0xff]
        %v217 = vld [vmem:[%s0 + $0x8] sm:$0xff]
        %v218 = vld [vmem:[%s0 + $0x10] sm:$0xff]
        %v219 = vld [vmem:[%s0 + $0x18] sm:$0xff]
        %v220 = vld [vmem:[%s0 + $0x20] sm:$0xff]
        %v221 = vld [vmem:[%s0 + $0x28] sm:$0xff]
        %v222 = vld [vmem:[%s0 + $0x30] sm:$0xff]
        %v223 = vld [vmem:[%s0 + $0x38] sm:$0xff]
        %vm224 = vcmask 64512
        %v226 = vsel %vm224, %v208, 0
        %v229 = vsel %vm224, %v209, 0
        %v232 = vsel %vm224, %v210, 0
        %v235 = vsel %vm224, %v211, 0
        %v238 = vsel %vm224, %v212, 0
        %v241 = vsel %vm224, %v213, 0
        %v244 = vsel %vm224, %v214, 0
        %v247 = vsel %vm224, %v215, 0
        %249 = vmatpush.msra.mxu0 0.0
        %250 = vmatpush.msra.mxu0 0.0
        %251 = vmatpush.msra.mxu0 0.0
        %252 = vmatpush.msra.mxu0 0.0
        %253 = vmatpush.msra.mxu0 0.0
        %254 = vmatpush.msra.mxu0 0.0
        %255 = vmatpush.msra.mxu0 0.0
        %256 = vmatpush.msra.mxu0 0.0
        %257 = vmatpush.msra.mxu0 0.0
        %258 = vmatpush.msra.mxu0 0.0
        %259 = vmatpush.msra.mxu0 0.0
        %260 = vmatpush.msra.mxu0 0.0
        %261 = vmatpush.msra.mxu0 0.0
        %262 = vmatpush.msra.mxu0 0.0
        %263 = vmatpush.msra.mxu0 0.0
        %264 = vmatpush.msra.mxu0 %v200
        %265 = vmatmul.f32.gmra.mxu0 %v226
        %v266 = vpop.f32.mrf.mxu0
        %v267 = vadd.f32 0.0, %v266
        %268 = vmatmul.f32.gmra.mxu0 %v229
        %v269 = vpop.f32.mrf.mxu0
        %v270 = vadd.f32 0.0, %v269
        %271 = vmatmul.f32.gmra.mxu0 %v232
        %v272 = vpop.f32.mrf.mxu0
        %v273 = vadd.f32 0.0, %v272
        %274 = vmatmul.f32.gmra.mxu0 %v235
        %v275 = vpop.f32.mrf.mxu0
        %v276 = vadd.f32 0.0, %v275
        %277 = vmatmul.f32.gmra.mxu0 %v238
        %v278 = vpop.f32.mrf.mxu0
        %v279 = vadd.f32 0.0, %v278
        %280 = vmatmul.f32.gmra.mxu0 %v241
        %v281 = vpop.f32.mrf.mxu0
        %v282 = vadd.f32 0.0, %v281
        %283 = vmatmul.f32.gmra.mxu0 %v244
        %v284 = vpop.f32.mrf.mxu0
        %v285 = vadd.f32 0.0, %v284
        %286 = vmatmul.f32.gmra.mxu0 %v247
        %v287 = vpop.f32.mrf.mxu0
        %v288 = vadd.f32 0.0, %v287
        %289 = vdwg.mxu0
        %290 = vmatpush.msra.mxu0 0.0
        %291 = vmatpush.msra.mxu0 0.0
        %292 = vmatpush.msra.mxu0 0.0
        %293 = vmatpush.msra.mxu0 0.0
        %294 = vmatpush.msra.mxu0 0.0
        %295 = vmatpush.msra.mxu0 0.0
        %296 = vmatpush.msra.mxu0 0.0
        %297 = vmatpush.msra.mxu0 0.0
        %298 = vmatpush.msra.mxu0 0.0
        %299 = vmatpush.msra.mxu0 0.0
        %300 = vmatpush.msra.mxu0 0.0
        %301 = vmatpush.msra.mxu0 0.0
        %302 = vmatpush.msra.mxu0 0.0
        %303 = vmatpush.msra.mxu0 0.0
        %304 = vmatpush.msra.mxu0 0.0
        %305 = vmatpush.msra.mxu0 %v201
        %306 = vmatmul.f32.gmra.mxu0 %v226
        %v307 = vpop.f32.mrf.mxu0
        %v308 = vadd.f32 0.0, %v307
        %309 = vmatmul.f32.gmra.mxu0 %v229
        %v310 = vpop.f32.mrf.mxu0
        %v311 = vadd.f32 0.0, %v310
        %312 = vmatmul.f32.gmra.mxu0 %v232
        %v313 = vpop.f32.mrf.mxu0
        %v314 = vadd.f32 0.0, %v313
        %315 = vmatmul.f32.gmra.mxu0 %v235
        %v316 = vpop.f32.mrf.mxu0
        %v317 = vadd.f32 0.0, %v316
        %318 = vmatmul.f32.gmra.mxu0 %v238
        %v319 = vpop.f32.mrf.mxu0
        %v320 = vadd.f32 0.0, %v319
        %321 = vmatmul.f32.gmra.mxu0 %v241
        %v322 = vpop.f32.mrf.mxu0
        %v323 = vadd.f32 0.0, %v322
        %324 = vmatmul.f32.gmra.mxu0 %v244
        %v325 = vpop.f32.mrf.mxu0
        %v326 = vadd.f32 0.0, %v325
        %327 = vmatmul.f32.gmra.mxu0 %v247
        %v328 = vpop.f32.mrf.mxu0
        %v329 = vadd.f32 0.0, %v328
        %330 = vdwg.mxu0
        %331 = vmatpush.msra.mxu0 0.0
        %332 = vmatpush.msra.mxu0 0.0
        %333 = vmatpush.msra.mxu0 0.0
        %334 = vmatpush.msra.mxu0 0.0
        %335 = vmatpush.msra.mxu0 0.0
        %336 = vmatpush.msra.mxu0 0.0
        %337 = vmatpush.msra.mxu0 0.0
        %338 = vmatpush.msra.mxu0 0.0
        %339 = vmatpush.msra.mxu0 0.0
        %340 = vmatpush.msra.mxu0 0.0
        %341 = vmatpush.msra.mxu0 0.0
        %342 = vmatpush.msra.mxu0 0.0
        %343 = vmatpush.msra.mxu0 0.0
        %344 = vmatpush.msra.mxu0 0.0
        %345 = vmatpush.msra.mxu0 0.0
        %346 = vmatpush.msra.mxu0 %v202
        %347 = vmatmul.f32.gmra.mxu0 %v226
        %v348 = vpop.f32.mrf.mxu0
        %v349 = vadd.f32 0.0, %v348
        %350 = vmatmul.f32.gmra.mxu0 %v229
        %v351 = vpop.f32.mrf.mxu0
        %v352 = vadd.f32 0.0, %v351
        %353 = vmatmul.f32.gmra.mxu0 %v232
        %v354 = vpop.f32.mrf.mxu0
        %v355 = vadd.f32 0.0, %v354
        %356 = vmatmul.f32.gmra.mxu0 %v235
        %v357 = vpop.f32.mrf.mxu0
        %v358 = vadd.f32 0.0, %v357
        %359 = vmatmul.f32.gmra.mxu0 %v238
        %v360 = vpop.f32.mrf.mxu0
        %v361 = vadd.f32 0.0, %v360
        %362 = vmatmul.f32.gmra.mxu0 %v241
        %v363 = vpop.f32.mrf.mxu0
        %v364 = vadd.f32 0.0, %v363
        %365 = vmatmul.f32.gmra.mxu0 %v244
        %v366 = vpop.f32.mrf.mxu0
        %v367 = vadd.f32 0.0, %v366
        %368 = vmatmul.f32.gmra.mxu0 %v247
        %v369 = vpop.f32.mrf.mxu0
        %v370 = vadd.f32 0.0, %v369
        %371 = vdwg.mxu0
        %372 = vmatpush.msra.mxu0 0.0
        %373 = vmatpush.msra.mxu0 0.0
        %374 = vmatpush.msra.mxu0 0.0
        %375 = vmatpush.msra.mxu0 0.0
        %376 = vmatpush.msra.mxu0 0.0
        %377 = vmatpush.msra.mxu0 0.0
        %378 = vmatpush.msra.mxu0 0.0
        %379 = vmatpush.msra.mxu0 0.0
        %380 = vmatpush.msra.mxu0 0.0
        %381 = vmatpush.msra.mxu0 0.0
        %382 = vmatpush.msra.mxu0 0.0
        %383 = vmatpush.msra.mxu0 0.0
        %384 = vmatpush.msra.mxu0 0.0
        %385 = vmatpush.msra.mxu0 0.0
        %386 = vmatpush.msra.mxu0 0.0
        %387 = vmatpush.msra.mxu0 %v203
        %388 = vmatmul.f32.gmra.mxu0 %v226
        %v389 = vpop.f32.mrf.mxu0
        %v390 = vadd.f32 0.0, %v389
        %391 = vmatmul.f32.gmra.mxu0 %v229
        %v392 = vpop.f32.mrf.mxu0
        %v393 = vadd.f32 0.0, %v392
        %394 = vmatmul.f32.gmra.mxu0 %v232
        %v395 = vpop.f32.mrf.mxu0
        %v396 = vadd.f32 0.0, %v395
        %397 = vmatmul.f32.gmra.mxu0 %v235
        %v398 = vpop.f32.mrf.mxu0
        %v399 = vadd.f32 0.0, %v398
        %400 = vmatmul.f32.gmra.mxu0 %v238
        %v401 = vpop.f32.mrf.mxu0
        %v402 = vadd.f32 0.0, %v401
        %403 = vmatmul.f32.gmra.mxu0 %v241
        %v404 = vpop.f32.mrf.mxu0
        %v405 = vadd.f32 0.0, %v404
        %406 = vmatmul.f32.gmra.mxu0 %v244
        %v407 = vpop.f32.mrf.mxu0
        %v408 = vadd.f32 0.0, %v407
        %409 = vmatmul.f32.gmra.mxu0 %v247
        %v410 = vpop.f32.mrf.mxu0
        %v411 = vadd.f32 0.0, %v410
        %412 = vdwg.mxu0
        %413 = vmatpush.msra.mxu0 0.0
        %414 = vmatpush.msra.mxu0 0.0
        %415 = vmatpush.msra.mxu0 0.0
        %416 = vmatpush.msra.mxu0 0.0
        %417 = vmatpush.msra.mxu0 0.0
        %418 = vmatpush.msra.mxu0 0.0
        %419 = vmatpush.msra.mxu0 0.0
        %420 = vmatpush.msra.mxu0 0.0
        %421 = vmatpush.msra.mxu0 0.0
        %422 = vmatpush.msra.mxu0 0.0
        %423 = vmatpush.msra.mxu0 0.0
        %424 = vmatpush.msra.mxu0 0.0
        %425 = vmatpush.msra.mxu0 0.0
        %426 = vmatpush.msra.mxu0 0.0
        %427 = vmatpush.msra.mxu0 0.0
        %428 = vmatpush.msra.mxu0 %v204
        %429 = vmatmul.f32.gmra.mxu0 %v226
        %v430 = vpop.f32.mrf.mxu0
        %v431 = vadd.f32 0.0, %v430
        %432 = vmatmul.f32.gmra.mxu0 %v229
        %v433 = vpop.f32.mrf.mxu0
        %v434 = vadd.f32 0.0, %v433
        %435 = vmatmul.f32.gmra.mxu0 %v232
        %v436 = vpop.f32.mrf.mxu0
        %v437 = vadd.f32 0.0, %v436
        %438 = vmatmul.f32.gmra.mxu0 %v235
        %v439 = vpop.f32.mrf.mxu0
        %v440 = vadd.f32 0.0, %v439
        %441 = vmatmul.f32.gmra.mxu0 %v238
        %v442 = vpop.f32.mrf.mxu0
        %v443 = vadd.f32 0.0, %v442
        %444 = vmatmul.f32.gmra.mxu0 %v241
        %v445 = vpop.f32.mrf.mxu0
        %v446 = vadd.f32 0.0, %v445
        %447 = vmatmul.f32.gmra.mxu0 %v244
        %v448 = vpop.f32.mrf.mxu0
        %v449 = vadd.f32 0.0, %v448
        %450 = vmatmul.f32.gmra.mxu0 %v247
        %v451 = vpop.f32.mrf.mxu0
        %v452 = vadd.f32 0.0, %v451
        %453 = vdwg.mxu0
        %454 = vmatpush.msra.mxu0 0.0
        %455 = vmatpush.msra.mxu0 0.0
        %456 = vmatpush.msra.mxu0 0.0
        %457 = vmatpush.msra.mxu0 0.0
        %458 = vmatpush.msra.mxu0 0.0
        %459 = vmatpush.msra.mxu0 0.0
        %460 = vmatpush.msra.mxu0 0.0
        %461 = vmatpush.msra.mxu0 0.0
        %462 = vmatpush.msra.mxu0 0.0
        %463 = vmatpush.msra.mxu0 0.0
        %464 = vmatpush.msra.mxu0 0.0
        %465 = vmatpush.msra.mxu0 0.0
        %466 = vmatpush.msra.mxu0 0.0
        %467 = vmatpush.msra.mxu0 0.0
        %468 = vmatpush.msra.mxu0 0.0
        %469 = vmatpush.msra.mxu0 %v205
        %470 = vmatmul.f32.gmra.mxu0 %v226
        %v471 = vpop.f32.mrf.mxu0
        %v472 = vadd.f32 0.0, %v471
        %473 = vmatmul.f32.gmra.mxu0 %v229
        %v474 = vpop.f32.mrf.mxu0
        %v475 = vadd.f32 0.0, %v474
        %476 = vmatmul.f32.gmra.mxu0 %v232
        %v477 = vpop.f32.mrf.mxu0
        %v478 = vadd.f32 0.0, %v477
        %479 = vmatmul.f32.gmra.mxu0 %v235
        %v480 = vpop.f32.mrf.mxu0
        %v481 = vadd.f32 0.0, %v480
        %482 = vmatmul.f32.gmra.mxu0 %v238
        %v483 = vpop.f32.mrf.mxu0
        %v484 = vadd.f32 0.0, %v483
        %485 = vmatmul.f32.gmra.mxu0 %v241
        %v486 = vpop.f32.mrf.mxu0
        %v487 = vadd.f32 0.0, %v486
        %488 = vmatmul.f32.gmra.mxu0 %v244
        %v489 = vpop.f32.mrf.mxu0
        %v490 = vadd.f32 0.0, %v489
        %491 = vmatmul.f32.gmra.mxu0 %v247
        %v492 = vpop.f32.mrf.mxu0
        %v493 = vadd.f32 0.0, %v492
        %494 = vdwg.mxu0
        %495 = vmatpush.msra.mxu0 0.0
        %496 = vmatpush.msra.mxu0 0.0
        %497 = vmatpush.msra.mxu0 0.0
        %498 = vmatpush.msra.mxu0 0.0
        %499 = vmatpush.msra.mxu0 0.0
        %500 = vmatpush.msra.mxu0 0.0
        %501 = vmatpush.msra.mxu0 0.0
        %502 = vmatpush.msra.mxu0 0.0
        %503 = vmatpush.msra.mxu0 0.0
        %504 = vmatpush.msra.mxu0 0.0
        %505 = vmatpush.msra.mxu0 0.0
        %506 = vmatpush.msra.mxu0 0.0
        %507 = vmatpush.msra.mxu0 0.0
        %508 = vmatpush.msra.mxu0 0.0
        %509 = vmatpush.msra.mxu0 0.0
        %510 = vmatpush.msra.mxu0 %v206
        %511 = vmatmul.f32.gmra.mxu0 %v226
        %v512 = vpop.f32.mrf.mxu0
        %v513 = vadd.f32 0.0, %v512
        %514 = vmatmul.f32.gmra.mxu0 %v229
        %v515 = vpop.f32.mrf.mxu0
        %v516 = vadd.f32 0.0, %v515
        %517 = vmatmul.f32.gmra.mxu0 %v232
        %v518 = vpop.f32.mrf.mxu0
        %v519 = vadd.f32 0.0, %v518
        %520 = vmatmul.f32.gmra.mxu0 %v235
        %v521 = vpop.f32.mrf.mxu0
        %v522 = vadd.f32 0.0, %v521
        %523 = vmatmul.f32.gmra.mxu0 %v238
        %v524 = vpop.f32.mrf.mxu0
        %v525 = vadd.f32 0.0, %v524
        %526 = vmatmul.f32.gmra.mxu0 %v241
        %v527 = vpop.f32.mrf.mxu0
        %v528 = vadd.f32 0.0, %v527
        %529 = vmatmul.f32.gmra.mxu0 %v244
        %v530 = vpop.f32.mrf.mxu0
        %v531 = vadd.f32 0.0, %v530
        %532 = vmatmul.f32.gmra.mxu0 %v247
        %v533 = vpop.f32.mrf.mxu0
        %v534 = vadd.f32 0.0, %v533
        %535 = vdwg.mxu0
        %536 = vmatpush.msra.mxu0 0.0
        %537 = vmatpush.msra.mxu0 0.0
        %538 = vmatpush.msra.mxu0 0.0
        %539 = vmatpush.msra.mxu0 0.0
        %540 = vmatpush.msra.mxu0 0.0
        %541 = vmatpush.msra.mxu0 0.0
        %542 = vmatpush.msra.mxu0 0.0
        %543 = vmatpush.msra.mxu0 0.0
        %544 = vmatpush.msra.mxu0 0.0
        %545 = vmatpush.msra.mxu0 0.0
        %546 = vmatpush.msra.mxu0 0.0
        %547 = vmatpush.msra.mxu0 0.0
        %548 = vmatpush.msra.mxu0 0.0
        %549 = vmatpush.msra.mxu0 0.0
        %550 = vmatpush.msra.mxu0 0.0
        %551 = vmatpush.msra.mxu0 %v207
        %552 = vmatmul.f32.gmra.mxu0 %v226
        %v553 = vpop.f32.mrf.mxu0
        %v554 = vadd.f32 0.0, %v553
        %555 = vmatmul.f32.gmra.mxu0 %v229
        %v556 = vpop.f32.mrf.mxu0
        %v557 = vadd.f32 0.0, %v556
        %558 = vmatmul.f32.gmra.mxu0 %v232
        %v559 = vpop.f32.mrf.mxu0
        %v560 = vadd.f32 0.0, %v559
        %561 = vmatmul.f32.gmra.mxu0 %v235
        %v562 = vpop.f32.mrf.mxu0
        %v563 = vadd.f32 0.0, %v562
        %564 = vmatmul.f32.gmra.mxu0 %v238
        %v565 = vpop.f32.mrf.mxu0
        %v566 = vadd.f32 0.0, %v565
        %567 = vmatmul.f32.gmra.mxu0 %v241
        %v568 = vpop.f32.mrf.mxu0
        %v569 = vadd.f32 0.0, %v568
        %570 = vmatmul.f32.gmra.mxu0 %v244
        %v571 = vpop.f32.mrf.mxu0
        %v572 = vadd.f32 0.0, %v571
        %573 = vmatmul.f32.gmra.mxu0 %v247
        %v574 = vpop.f32.mrf.mxu0
        %v575 = vadd.f32 0.0, %v574
        %576 = vdwg.mxu0
        %578 = vset.pattern.permute.xlu0 0
        %579 = vperm.xlu0 %578, %v216
        %v580 = vpop.permute.xlu0 %579
        %583 = vset.pattern.permute.xlu0 0
        %584 = vperm.xlu0 %583, %v217
        %v585 = vpop.permute.xlu0 %584
        %588 = vset.pattern.permute.xlu0 0
        %589 = vperm.xlu0 %588, %v218
        %v590 = vpop.permute.xlu0 %589
        %593 = vset.pattern.permute.xlu0 0
        %594 = vperm.xlu0 %593, %v219
        %v595 = vpop.permute.xlu0 %594
        %598 = vset.pattern.permute.xlu0 0
        %599 = vperm.xlu0 %598, %v220
        %v600 = vpop.permute.xlu0 %599
        %603 = vset.pattern.permute.xlu0 0
        %604 = vperm.xlu0 %603, %v221
        %v605 = vpop.permute.xlu0 %604
        %608 = vset.pattern.permute.xlu0 0
        %609 = vperm.xlu0 %608, %v222
        %v610 = vpop.permute.xlu0 %609
        %613 = vset.pattern.permute.xlu0 0
        %614 = vperm.xlu0 %613, %v223
        %v615 = vpop.permute.xlu0 %614
        %v617 = vadd.f32 %v580, %v267
        %v618 = vadd.f32 %v580, %v308
        %v619 = vadd.f32 %v580, %v349
        %v620 = vadd.f32 %v580, %v390
        %v621 = vadd.f32 %v580, %v431
        %v622 = vadd.f32 %v580, %v472
        %v623 = vadd.f32 %v580, %v513
        %v624 = vadd.f32 %v580, %v554
        %v625 = vadd.f32 %v585, %v270
        %v626 = vadd.f32 %v585, %v311
        %v627 = vadd.f32 %v585, %v352
        %v628 = vadd.f32 %v585, %v393
        %v629 = vadd.f32 %v585, %v434
        %v630 = vadd.f32 %v585, %v475
        %v631 = vadd.f32 %v585, %v516
        %v632 = vadd.f32 %v585, %v557
        %v633 = vadd.f32 %v590, %v273
        %v634 = vadd.f32 %v590, %v314
        %v635 = vadd.f32 %v590, %v355
        %v636 = vadd.f32 %v590, %v396
        %v637 = vadd.f32 %v590, %v437
        %v638 = vadd.f32 %v590, %v478
        %v639 = vadd.f32 %v590, %v519
        %v640 = vadd.f32 %v590, %v560
        %v641 = vadd.f32 %v595, %v276
        %v642 = vadd.f32 %v595, %v317
        %v643 = vadd.f32 %v595, %v358
        %v644 = vadd.f32 %v595, %v399
        %v645 = vadd.f32 %v595, %v440
        %v646 = vadd.f32 %v595, %v481
        %v647 = vadd.f32 %v595, %v522
        %v648 = vadd.f32 %v595, %v563
        %v649 = vadd.f32 %v600, %v279
        %v650 = vadd.f32 %v600, %v320
        %v651 = vadd.f32 %v600, %v361
        %v652 = vadd.f32 %v600, %v402
        %v653 = vadd.f32 %v600, %v443
        %v654 = vadd.f32 %v600, %v484
        %v655 = vadd.f32 %v600, %v525
        %v656 = vadd.f32 %v600, %v566
        %v657 = vadd.f32 %v605, %v282
        %v658 = vadd.f32 %v605, %v323
        %v659 = vadd.f32 %v605, %v364
        %v660 = vadd.f32 %v605, %v405
        %v661 = vadd.f32 %v605, %v446
        %v662 = vadd.f32 %v605, %v487
        %v663 = vadd.f32 %v605, %v528
        %v664 = vadd.f32 %v605, %v569
        %v665 = vadd.f32 %v610, %v285
        %v666 = vadd.f32 %v610, %v326
        %v667 = vadd.f32 %v610, %v367
        %v668 = vadd.f32 %v610, %v408
        %v669 = vadd.f32 %v610, %v449
        %v670 = vadd.f32 %v610, %v490
        %v671 = vadd.f32 %v610, %v531
        %v672 = vadd.f32 %v610, %v572
        %v673 = vadd.f32 %v615, %v288
        %v674 = vadd.f32 %v615, %v329
        %v675 = vadd.f32 %v615, %v370
        %v676 = vadd.f32 %v615, %v411
        %v677 = vadd.f32 %v615, %v452
        %v678 = vadd.f32 %v615, %v493
        %v679 = vadd.f32 %v615, %v534
        %v680 = vadd.f32 %v615, %v575
        %v681 = vmin.f32 %v617, %v625
        %v682 = vmin.f32 %v681, %v633
        %v683 = vmin.f32 %v682, %v641
        %v684 = vmin.f32 %v683, %v649
        %v685 = vmin.f32 %v684, %v657
        %v686 = vmin.f32 %v685, %v665
        %v687 = vmin.f32 %v686, %v673
        %v688 = vrot.slane %v687, 4
        %v689 = vmin.f32 %v687, %v688
        %v690 = vrot.slane %v689, 2
        %v691 = vmin.f32 %v689, %v690
        %v692 = vrot.slane %v691, 1
        %v693 = vmin.f32 %v691, %v692
        %v694 = vmin.f32 %v618, %v626
        %v695 = vmin.f32 %v694, %v634
        %v696 = vmin.f32 %v695, %v642
        %v697 = vmin.f32 %v696, %v650
        %v698 = vmin.f32 %v697, %v658
        %v699 = vmin.f32 %v698, %v666
        %v700 = vmin.f32 %v699, %v674
        %v701 = vrot.slane %v700, 4
        %v702 = vmin.f32 %v700, %v701
        %v703 = vrot.slane %v702, 2
        %v704 = vmin.f32 %v702, %v703
        %v705 = vrot.slane %v704, 1
        %v706 = vmin.f32 %v704, %v705
        %v707 = vmin.f32 %v619, %v627
        %v708 = vmin.f32 %v707, %v635
        %v709 = vmin.f32 %v708, %v643
        %v710 = vmin.f32 %v709, %v651
        %v711 = vmin.f32 %v710, %v659
        %v712 = vmin.f32 %v711, %v667
        %v713 = vmin.f32 %v712, %v675
        %v714 = vrot.slane %v713, 4
        %v715 = vmin.f32 %v713, %v714
        %v716 = vrot.slane %v715, 2
        %v717 = vmin.f32 %v715, %v716
        %v718 = vrot.slane %v717, 1
        %v719 = vmin.f32 %v717, %v718
        %v720 = vmin.f32 %v620, %v628
        %v721 = vmin.f32 %v720, %v636
        %v722 = vmin.f32 %v721, %v644
        %v723 = vmin.f32 %v722, %v652
        %v724 = vmin.f32 %v723, %v660
        %v725 = vmin.f32 %v724, %v668
        %v726 = vmin.f32 %v725, %v676
        %v727 = vrot.slane %v726, 4
        %v728 = vmin.f32 %v726, %v727
        %v729 = vrot.slane %v728, 2
        %v730 = vmin.f32 %v728, %v729
        %v731 = vrot.slane %v730, 1
        %v732 = vmin.f32 %v730, %v731
        %v733 = vmin.f32 %v621, %v629
        %v734 = vmin.f32 %v733, %v637
        %v735 = vmin.f32 %v734, %v645
        %v736 = vmin.f32 %v735, %v653
        %v737 = vmin.f32 %v736, %v661
        %v738 = vmin.f32 %v737, %v669
        %v739 = vmin.f32 %v738, %v677
        %v740 = vrot.slane %v739, 4
        %v741 = vmin.f32 %v739, %v740
        %v742 = vrot.slane %v741, 2
        %v743 = vmin.f32 %v741, %v742
        %v744 = vrot.slane %v743, 1
        %v745 = vmin.f32 %v743, %v744
        %v746 = vmin.f32 %v622, %v630
        %v747 = vmin.f32 %v746, %v638
        %v748 = vmin.f32 %v747, %v646
        %v749 = vmin.f32 %v748, %v654
        %v750 = vmin.f32 %v749, %v662
        %v751 = vmin.f32 %v750, %v670
        %v752 = vmin.f32 %v751, %v678
        %v753 = vrot.slane %v752, 4
        %v754 = vmin.f32 %v752, %v753
        %v755 = vrot.slane %v754, 2
        %v756 = vmin.f32 %v754, %v755
        %v757 = vrot.slane %v756, 1
        %v758 = vmin.f32 %v756, %v757
        %v759 = vmin.f32 %v623, %v631
        %v760 = vmin.f32 %v759, %v639
        %v761 = vmin.f32 %v760, %v647
        %v762 = vmin.f32 %v761, %v655
        %v763 = vmin.f32 %v762, %v663
        %v764 = vmin.f32 %v763, %v671
        %v765 = vmin.f32 %v764, %v679
        %v766 = vrot.slane %v765, 4
        %v767 = vmin.f32 %v765, %v766
        %v768 = vrot.slane %v767, 2
        %v769 = vmin.f32 %v767, %v768
        %v770 = vrot.slane %v769, 1
        %v771 = vmin.f32 %v769, %v770
        %v772 = vmin.f32 %v624, %v632
        %v773 = vmin.f32 %v772, %v640
        %v774 = vmin.f32 %v773, %v648
        %v775 = vmin.f32 %v774, %v656
        %v776 = vmin.f32 %v775, %v664
        %v777 = vmin.f32 %v776, %v672
        %v778 = vmin.f32 %v777, %v680
        %v779 = vrot.slane %v778, 4
        %v780 = vmin.f32 %v778, %v779
        %v781 = vrot.slane %v780, 2
        %v782 = vmin.f32 %v780, %v781
        %v783 = vrot.slane %v782, 1
        %v784 = vmin.f32 %v782, %v783
        %v785 = vlaneseq
        %v786 = vshrl.u32 %v785, 7
        %v787 = vadd.s32 %v786, 8
        %v788 = vadd.s32 %v786, 16
        %v789 = vadd.s32 %v786, 24
        %v790 = vadd.s32 %v786, 32
        %v791 = vadd.s32 %v786, 40
        %v792 = vadd.s32 %v786, 48
        %v793 = vadd.s32 %v786, 56
        %vm794 = vcmp.eq.f32.partialorder %v617, %v693
        %vm795 = vcmp.eq.f32.partialorder %v618, %v706
        %vm796 = vcmp.eq.f32.partialorder %v619, %v719
        %vm797 = vcmp.eq.f32.partialorder %v620, %v732
        %vm798 = vcmp.eq.f32.partialorder %v621, %v745
        %vm799 = vcmp.eq.f32.partialorder %v622, %v758
        %vm800 = vcmp.eq.f32.partialorder %v623, %v771
        %vm801 = vcmp.eq.f32.partialorder %v624, %v784
        %vm802 = vcmp.eq.f32.partialorder %v625, %v693
        %vm803 = vcmp.eq.f32.partialorder %v626, %v706
        %vm804 = vcmp.eq.f32.partialorder %v627, %v719
        %vm805 = vcmp.eq.f32.partialorder %v628, %v732
        %vm806 = vcmp.eq.f32.partialorder %v629, %v745
        %vm807 = vcmp.eq.f32.partialorder %v630, %v758
        %vm808 = vcmp.eq.f32.partialorder %v631, %v771
        %vm809 = vcmp.eq.f32.partialorder %v632, %v784
        %vm810 = vcmp.eq.f32.partialorder %v633, %v693
        %vm811 = vcmp.eq.f32.partialorder %v634, %v706
        %vm812 = vcmp.eq.f32.partialorder %v635, %v719
        %vm813 = vcmp.eq.f32.partialorder %v636, %v732
        %vm814 = vcmp.eq.f32.partialorder %v637, %v745
        %vm815 = vcmp.eq.f32.partialorder %v638, %v758
        %vm816 = vcmp.eq.f32.partialorder %v639, %v771
        %vm817 = vcmp.eq.f32.partialorder %v640, %v784
        %vm818 = vcmp.eq.f32.partialorder %v641, %v693
        %vm819 = vcmp.eq.f32.partialorder %v642, %v706
        %vm820 = vcmp.eq.f32.partialorder %v643, %v719
        %vm821 = vcmp.eq.f32.partialorder %v644, %v732
        %vm822 = vcmp.eq.f32.partialorder %v645, %v745
        %vm823 = vcmp.eq.f32.partialorder %v646, %v758
        %vm824 = vcmp.eq.f32.partialorder %v647, %v771
        %vm825 = vcmp.eq.f32.partialorder %v648, %v784
        %vm826 = vcmp.eq.f32.partialorder %v649, %v693
        %vm827 = vcmp.eq.f32.partialorder %v650, %v706
        %vm828 = vcmp.eq.f32.partialorder %v651, %v719
        %vm829 = vcmp.eq.f32.partialorder %v652, %v732
        %vm830 = vcmp.eq.f32.partialorder %v653, %v745
        %vm831 = vcmp.eq.f32.partialorder %v654, %v758
        %vm832 = vcmp.eq.f32.partialorder %v655, %v771
        %vm833 = vcmp.eq.f32.partialorder %v656, %v784
        %vm834 = vcmp.eq.f32.partialorder %v657, %v693
        %vm835 = vcmp.eq.f32.partialorder %v658, %v706
        %vm836 = vcmp.eq.f32.partialorder %v659, %v719
        %vm837 = vcmp.eq.f32.partialorder %v660, %v732
        %vm838 = vcmp.eq.f32.partialorder %v661, %v745
        %vm839 = vcmp.eq.f32.partialorder %v662, %v758
        %vm840 = vcmp.eq.f32.partialorder %v663, %v771
        %vm841 = vcmp.eq.f32.partialorder %v664, %v784
        %vm842 = vcmp.eq.f32.partialorder %v665, %v693
        %vm843 = vcmp.eq.f32.partialorder %v666, %v706
        %vm844 = vcmp.eq.f32.partialorder %v667, %v719
        %vm845 = vcmp.eq.f32.partialorder %v668, %v732
        %vm846 = vcmp.eq.f32.partialorder %v669, %v745
        %vm847 = vcmp.eq.f32.partialorder %v670, %v758
        %vm848 = vcmp.eq.f32.partialorder %v671, %v771
        %vm849 = vcmp.eq.f32.partialorder %v672, %v784
        %vm850 = vcmp.eq.f32.partialorder %v673, %v693
        %vm851 = vcmp.eq.f32.partialorder %v674, %v706
        %vm852 = vcmp.eq.f32.partialorder %v675, %v719
        %vm853 = vcmp.eq.f32.partialorder %v676, %v732
        %vm854 = vcmp.eq.f32.partialorder %v677, %v745
        %vm855 = vcmp.eq.f32.partialorder %v678, %v758
        %vm856 = vcmp.eq.f32.partialorder %v679, %v771
        %vm857 = vcmp.eq.f32.partialorder %v680, %v784
        %v858 = vsel %vm794, %v786, 64
        %v859 = vsel %vm795, %v786, 64
        %v860 = vsel %vm796, %v786, 64
        %v861 = vsel %vm797, %v786, 64
        %v862 = vsel %vm798, %v786, 64
        %v863 = vsel %vm799, %v786, 64
        %v864 = vsel %vm800, %v786, 64
        %v865 = vsel %vm801, %v786, 64
        %v866 = vsel %vm802, %v787, 64
        %v867 = vsel %vm803, %v787, 64
        %v868 = vsel %vm804, %v787, 64
        %v869 = vsel %vm805, %v787, 64
        %v870 = vsel %vm806, %v787, 64
        %v871 = vsel %vm807, %v787, 64
        %v872 = vsel %vm808, %v787, 64
        %v873 = vsel %vm809, %v787, 64
        %v874 = vsel %vm810, %v788, 64
        %v875 = vsel %vm811, %v788, 64
        %v876 = vsel %vm812, %v788, 64
        %v877 = vsel %vm813, %v788, 64
        %v878 = vsel %vm814, %v788, 64
        %v879 = vsel %vm815, %v788, 64
        %v880 = vsel %vm816, %v788, 64
        %v881 = vsel %vm817, %v788, 64
        %v882 = vsel %vm818, %v789, 64
        %v883 = vsel %vm819, %v789, 64
        %v884 = vsel %vm820, %v789, 64
        %v885 = vsel %vm821, %v789, 64
        %v886 = vsel %vm822, %v789, 64
        %v887 = vsel %vm823, %v789, 64
        %v888 = vsel %vm824, %v789, 64
        %v889 = vsel %vm825, %v789, 64
        %v890 = vsel %vm826, %v790, 64
        %v891 = vsel %vm827, %v790, 64
        %v892 = vsel %vm828, %v790, 64
        %v893 = vsel %vm829, %v790, 64
        %v894 = vsel %vm830, %v790, 64
        %v895 = vsel %vm831, %v790, 64
        %v896 = vsel %vm832, %v790, 64
        %v897 = vsel %vm833, %v790, 64
        %v898 = vsel %vm834, %v791, 64
        %v899 = vsel %vm835, %v791, 64
        %v900 = vsel %vm836, %v791, 64
        %v901 = vsel %vm837, %v791, 64
        %v902 = vsel %vm838, %v791, 64
        %v903 = vsel %vm839, %v791, 64
        %v904 = vsel %vm840, %v791, 64
        %v905 = vsel %vm841, %v791, 64
        %v906 = vsel %vm842, %v792, 64
        %v907 = vsel %vm843, %v792, 64
        %v908 = vsel %vm844, %v792, 64
        %v909 = vsel %vm845, %v792, 64
        %v910 = vsel %vm846, %v792, 64
        %v911 = vsel %vm847, %v792, 64
        %v912 = vsel %vm848, %v792, 64
        %v913 = vsel %vm849, %v792, 64
        %v914 = vsel %vm850, %v793, 64
        %v915 = vsel %vm851, %v793, 64
        %v916 = vsel %vm852, %v793, 64
        %v917 = vsel %vm853, %v793, 64
        %v918 = vsel %vm854, %v793, 64
        %v919 = vsel %vm855, %v793, 64
        %v920 = vsel %vm856, %v793, 64
        %v921 = vsel %vm857, %v793, 64
        %vm922 = vcmp.lt.s32.totalorder %v858, %v866
        %v923 = vsel %vm922, %v858, %v866
        %vm924 = vcmp.lt.s32.totalorder %v923, %v874
        %v925 = vsel %vm924, %v923, %v874
        %vm926 = vcmp.lt.s32.totalorder %v925, %v882
        %v927 = vsel %vm926, %v925, %v882
        %vm928 = vcmp.lt.s32.totalorder %v927, %v890
        %v929 = vsel %vm928, %v927, %v890
        %vm930 = vcmp.lt.s32.totalorder %v929, %v898
        %v931 = vsel %vm930, %v929, %v898
        %vm932 = vcmp.lt.s32.totalorder %v931, %v906
        %v933 = vsel %vm932, %v931, %v906
        %vm934 = vcmp.lt.s32.totalorder %v933, %v914
        %v935 = vsel %vm934, %v933, %v914
        %v936 = vrot.slane %v935, 4
        %vm937 = vcmp.lt.s32.totalorder %v935, %v936
        %v938 = vsel %vm937, %v935, %v936
        %v939 = vrot.slane %v938, 2
        %vm940 = vcmp.lt.s32.totalorder %v938, %v939
        %v941 = vsel %vm940, %v938, %v939
        %v942 = vrot.slane %v941, 1
        %vm943 = vcmp.lt.s32.totalorder %v941, %v942
        %v944 = vsel %vm943, %v941, %v942
        %vm945 = vcmp.lt.s32.totalorder %v859, %v867
        %v946 = vsel %vm945, %v859, %v867
        %vm947 = vcmp.lt.s32.totalorder %v946, %v875
        %v948 = vsel %vm947, %v946, %v875
        %vm949 = vcmp.lt.s32.totalorder %v948, %v883
        %v950 = vsel %vm949, %v948, %v883
        %vm951 = vcmp.lt.s32.totalorder %v950, %v891
        %v952 = vsel %vm951, %v950, %v891
        %vm953 = vcmp.lt.s32.totalorder %v952, %v899
        %v954 = vsel %vm953, %v952, %v899
        %vm955 = vcmp.lt.s32.totalorder %v954, %v907
        %v956 = vsel %vm955, %v954, %v907
        %vm957 = vcmp.lt.s32.totalorder %v956, %v915
        %v958 = vsel %vm957, %v956, %v915
        %v959 = vrot.slane %v958, 4
        %vm960 = vcmp.lt.s32.totalorder %v958, %v959
        %v961 = vsel %vm960, %v958, %v959
        %v962 = vrot.slane %v961, 2
        %vm963 = vcmp.lt.s32.totalorder %v961, %v962
        %v964 = vsel %vm963, %v961, %v962
        %v965 = vrot.slane %v964, 1
        %vm966 = vcmp.lt.s32.totalorder %v964, %v965
        %v967 = vsel %vm966, %v964, %v965
        %vm968 = vcmp.lt.s32.totalorder %v860, %v868
        %v969 = vsel %vm968, %v860, %v868
        %vm970 = vcmp.lt.s32.totalorder %v969, %v876
        %v971 = vsel %vm970, %v969, %v876
        %vm972 = vcmp.lt.s32.totalorder %v971, %v884
        %v973 = vsel %vm972, %v971, %v884
        %vm974 = vcmp.lt.s32.totalorder %v973, %v892
        %v975 = vsel %vm974, %v973, %v892
        %vm976 = vcmp.lt.s32.totalorder %v975, %v900
        %v977 = vsel %vm976, %v975, %v900
        %vm978 = vcmp.lt.s32.totalorder %v977, %v908
        %v979 = vsel %vm978, %v977, %v908
        %vm980 = vcmp.lt.s32.totalorder %v979, %v916
        %v981 = vsel %vm980, %v979, %v916
        %v982 = vrot.slane %v981, 4
        %vm983 = vcmp.lt.s32.totalorder %v981, %v982
        %v984 = vsel %vm983, %v981, %v982
        %v985 = vrot.slane %v984, 2
        %vm986 = vcmp.lt.s32.totalorder %v984, %v985
        %v987 = vsel %vm986, %v984, %v985
        %v988 = vrot.slane %v987, 1
        %vm989 = vcmp.lt.s32.totalorder %v987, %v988
        %v990 = vsel %vm989, %v987, %v988
        %vm991 = vcmp.lt.s32.totalorder %v861, %v869
        %v992 = vsel %vm991, %v861, %v869
        %vm993 = vcmp.lt.s32.totalorder %v992, %v877
        %v994 = vsel %vm993, %v992, %v877
        %vm995 = vcmp.lt.s32.totalorder %v994, %v885
        %v996 = vsel %vm995, %v994, %v885
        %vm997 = vcmp.lt.s32.totalorder %v996, %v893
        %v998 = vsel %vm997, %v996, %v893
        %vm999 = vcmp.lt.s32.totalorder %v998, %v901
        %v1000 = vsel %vm999, %v998, %v901
        %vm1001 = vcmp.lt.s32.totalorder %v1000, %v909
        %v1002 = vsel %vm1001, %v1000, %v909
        %vm1003 = vcmp.lt.s32.totalorder %v1002, %v917
        %v1004 = vsel %vm1003, %v1002, %v917
        %v1005 = vrot.slane %v1004, 4
        %vm1006 = vcmp.lt.s32.totalorder %v1004, %v1005
        %v1007 = vsel %vm1006, %v1004, %v1005
        %v1008 = vrot.slane %v1007, 2
        %vm1009 = vcmp.lt.s32.totalorder %v1007, %v1008
        %v1010 = vsel %vm1009, %v1007, %v1008
        %v1011 = vrot.slane %v1010, 1
        %vm1012 = vcmp.lt.s32.totalorder %v1010, %v1011
        %v1013 = vsel %vm1012, %v1010, %v1011
        %vm1014 = vcmp.lt.s32.totalorder %v862, %v870
        %v1015 = vsel %vm1014, %v862, %v870
        %vm1016 = vcmp.lt.s32.totalorder %v1015, %v878
        %v1017 = vsel %vm1016, %v1015, %v878
        %vm1018 = vcmp.lt.s32.totalorder %v1017, %v886
        %v1019 = vsel %vm1018, %v1017, %v886
        %vm1020 = vcmp.lt.s32.totalorder %v1019, %v894
        %v1021 = vsel %vm1020, %v1019, %v894
        %vm1022 = vcmp.lt.s32.totalorder %v1021, %v902
        %v1023 = vsel %vm1022, %v1021, %v902
        %vm1024 = vcmp.lt.s32.totalorder %v1023, %v910
        %v1025 = vsel %vm1024, %v1023, %v910
        %vm1026 = vcmp.lt.s32.totalorder %v1025, %v918
        %v1027 = vsel %vm1026, %v1025, %v918
        %v1028 = vrot.slane %v1027, 4
        %vm1029 = vcmp.lt.s32.totalorder %v1027, %v1028
        %v1030 = vsel %vm1029, %v1027, %v1028
        %v1031 = vrot.slane %v1030, 2
        %vm1032 = vcmp.lt.s32.totalorder %v1030, %v1031
        %v1033 = vsel %vm1032, %v1030, %v1031
        %v1034 = vrot.slane %v1033, 1
        %vm1035 = vcmp.lt.s32.totalorder %v1033, %v1034
        %v1036 = vsel %vm1035, %v1033, %v1034
        %vm1037 = vcmp.lt.s32.totalorder %v863, %v871
        %v1038 = vsel %vm1037, %v863, %v871
        %vm1039 = vcmp.lt.s32.totalorder %v1038, %v879
        %v1040 = vsel %vm1039, %v1038, %v879
        %vm1041 = vcmp.lt.s32.totalorder %v1040, %v887
        %v1042 = vsel %vm1041, %v1040, %v887
        %vm1043 = vcmp.lt.s32.totalorder %v1042, %v895
        %v1044 = vsel %vm1043, %v1042, %v895
        %vm1045 = vcmp.lt.s32.totalorder %v1044, %v903
        %v1046 = vsel %vm1045, %v1044, %v903
        %vm1047 = vcmp.lt.s32.totalorder %v1046, %v911
        %v1048 = vsel %vm1047, %v1046, %v911
        %vm1049 = vcmp.lt.s32.totalorder %v1048, %v919
        %v1050 = vsel %vm1049, %v1048, %v919
        %v1051 = vrot.slane %v1050, 4
        %vm1052 = vcmp.lt.s32.totalorder %v1050, %v1051
        %v1053 = vsel %vm1052, %v1050, %v1051
        %v1054 = vrot.slane %v1053, 2
        %vm1055 = vcmp.lt.s32.totalorder %v1053, %v1054
        %v1056 = vsel %vm1055, %v1053, %v1054
        %v1057 = vrot.slane %v1056, 1
        %vm1058 = vcmp.lt.s32.totalorder %v1056, %v1057
        %v1059 = vsel %vm1058, %v1056, %v1057
        %vm1060 = vcmp.lt.s32.totalorder %v864, %v872
        %v1061 = vsel %vm1060, %v864, %v872
        %vm1062 = vcmp.lt.s32.totalorder %v1061, %v880
        %v1063 = vsel %vm1062, %v1061, %v880
        %vm1064 = vcmp.lt.s32.totalorder %v1063, %v888
        %v1065 = vsel %vm1064, %v1063, %v888
        %vm1066 = vcmp.lt.s32.totalorder %v1065, %v896
        %v1067 = vsel %vm1066, %v1065, %v896
        %vm1068 = vcmp.lt.s32.totalorder %v1067, %v904
        %v1069 = vsel %vm1068, %v1067, %v904
        %vm1070 = vcmp.lt.s32.totalorder %v1069, %v912
        %v1071 = vsel %vm1070, %v1069, %v912
        %vm1072 = vcmp.lt.s32.totalorder %v1071, %v920
        %v1073 = vsel %vm1072, %v1071, %v920
        %v1074 = vrot.slane %v1073, 4
        %vm1075 = vcmp.lt.s32.totalorder %v1073, %v1074
        %v1076 = vsel %vm1075, %v1073, %v1074
        %v1077 = vrot.slane %v1076, 2
        %vm1078 = vcmp.lt.s32.totalorder %v1076, %v1077
        %v1079 = vsel %vm1078, %v1076, %v1077
        %v1080 = vrot.slane %v1079, 1
        %vm1081 = vcmp.lt.s32.totalorder %v1079, %v1080
        %v1082 = vsel %vm1081, %v1079, %v1080
        %vm1083 = vcmp.lt.s32.totalorder %v865, %v873
        %v1084 = vsel %vm1083, %v865, %v873
        %vm1085 = vcmp.lt.s32.totalorder %v1084, %v881
        %v1086 = vsel %vm1085, %v1084, %v881
        %vm1087 = vcmp.lt.s32.totalorder %v1086, %v889
        %v1088 = vsel %vm1087, %v1086, %v889
        %vm1089 = vcmp.lt.s32.totalorder %v1088, %v897
        %v1090 = vsel %vm1089, %v1088, %v897
        %vm1091 = vcmp.lt.s32.totalorder %v1090, %v905
        %v1092 = vsel %vm1091, %v1090, %v905
        %vm1093 = vcmp.lt.s32.totalorder %v1092, %v913
        %v1094 = vsel %vm1093, %v1092, %v913
        %vm1095 = vcmp.lt.s32.totalorder %v1094, %v921
        %v1096 = vsel %vm1095, %v1094, %v921
        %v1097 = vrot.slane %v1096, 4
        %vm1098 = vcmp.lt.s32.totalorder %v1096, %v1097
        %v1099 = vsel %vm1098, %v1096, %v1097
        %v1100 = vrot.slane %v1099, 2
        %vm1101 = vcmp.lt.s32.totalorder %v1099, %v1100
        %v1102 = vsel %vm1101, %v1099, %v1100
        %v1103 = vrot.slane %v1102, 1
        %vm1104 = vcmp.lt.s32.totalorder %v1102, %v1103
        %v1105 = vsel %vm1104, %v1102, %v1103
        %vm1106 = vcmp.lt.f32.partialorder %v693, inf
        %vm1107 = vcmp.lt.f32.partialorder %v706, inf
        %vm1108 = vcmp.lt.f32.partialorder %v719, inf
        %vm1109 = vcmp.lt.f32.partialorder %v732, inf
        %vm1110 = vcmp.lt.f32.partialorder %v745, inf
        %vm1111 = vcmp.lt.f32.partialorder %v758, inf
        %vm1112 = vcmp.lt.f32.partialorder %v771, inf
        %vm1113 = vcmp.lt.f32.partialorder %v784, inf
        %v1114 = vsel %vm1106, %v944, 0
        %v1115 = vsel %vm1107, %v967, 0
        %v1116 = vsel %vm1108, %v990, 0
        %v1117 = vsel %vm1109, %v1013, 0
        %v1118 = vsel %vm1110, %v1036, 0
        %v1119 = vsel %vm1111, %v1059, 0
        %v1120 = vsel %vm1112, %v1082, 0
        %v1121 = vsel %vm1113, %v1105, 0
        %v1122 = vrot.slane %v1115, 7
        %v1123 = vrot.slane %v1116, 6
        %v1124 = vrot.slane %v1117, 5
        %v1125 = vrot.slane %v1118, 4
        %v1126 = vrot.slane %v1119, 3
        %v1127 = vrot.slane %v1120, 2
        %v1128 = vrot.slane %v1121, 1
        %vm1129 = vcmask 1040384
        %v1130 = vsel %vm1129, %v1114, %v1122
        %vm1131 = vcmask 1042434
        %v1132 = vsel %vm1131, %v1123, %v1124
        %vm1133 = vcmask 1041408
        %v1134 = vsel %vm1133, %v1130, %v1132
        %vm1135 = vcmask 1044484
        %v1136 = vsel %vm1135, %v1125, %v1126
        %vm1137 = vcmask 1046534
        %v1138 = vsel %vm1137, %v1127, %v1128
        %vm1139 = vcmask 1045508
        %v1140 = vsel %vm1139, %v1136, %v1138
        %vm1141 = vcmask 1043456
        %v1142 = vsel %vm1141, %v1134, %v1140
        %1143 = vst [vmem:[%s188] sm:$0xff] %v1142
        %s1144 = sand.u32 %s109, 1
        %s1145 = scalar_lea.sflag [#allocation3], %s1144
        %s1146 = sand.u32 %s109, 1
        %s1147 = smul.addr %s1146, 8
        %s1148 = scalar_lea.vmem [#allocation2], %s1147
        // Predicated region
        $region33: #{tpu_custom_call.1} parent=31 // pred_check
          %p1149 = pneg %p119
        $region34: #{tpu_custom_call.1} parent=31 // pred_check_branch
          %1151 = sbr.rel (%p1149) target = $region36
        $region35: #{tpu_custom_call.1} parent=31 // pred_region
          %s1152 = smul.u32 8, %s22
          %1154 = vsyncadd %s1145, 0
          %s1155 = smul.addr %s21, 8
          %s1156 = sadd.s32 %s1152, %s1155
          %s1157 = scalar_lea.hbm %s3, %s1156
          %s1159 = sshll.u32 %s1148, 4
          %s1160 = int_to_ptr.vmem [resolvable:$true] %s1159
          %s1161 = sshll.u32 %s1157, 4
          %s1162 = int_to_ptr.hbm [resolvable:$true] %s1161
          %1164 = dma.vmem_to_hbm [thread:$0]  %s1160, 128, %s1162, %s1145
        $region36: #{tpu_custom_call.1} parent=31 // pred_fallthru
          _
      $region32: #{tpu_custom_call.1} parent=5 // pred_fallthru
        _
      %p1165 = scmp.le.s32.totalorder 2, %s12
      // Predicated region
      $region37: #{tpu_custom_call.1} parent=5 // pred_check
        %p1166 = pneg %p1165
      $region38: #{tpu_custom_call.1} parent=5 // pred_check_branch
        %1168 = sbr.rel (%p1166) target = $region40
      $region39: #{tpu_custom_call.1} parent=5 // pred_region
        %s1169 = ssub.s32 %s12, 2
        // Predicated region
        $region41: #{tpu_custom_call.1} parent=39 // pred_check
          %p1170 = pneg %p125
        $region42: #{tpu_custom_call.1} parent=39 // pred_check_branch
          %1172 = sbr.rel (%p1170) target = $region44
        $region43: #{tpu_custom_call.1} parent=39 // pred_region
          %s1173 = sand.u32 %s110, 1
          %s1174 = scalar_lea.sflag [#allocation3], %s1173
          %s1175 = sand.u32 %s110, 1
          %s1176 = smul.addr %s1175, 8
          %s1177 = scalar_lea.vmem [#allocation2], %s1176
          %1179 = dma.done %s1174, 128
        $region44: #{tpu_custom_call.1} parent=39 // pred_fallthru
          _
      $region40: #{tpu_custom_call.1} parent=5 // pred_fallthru
        _
    $region6: #{tpu_custom_call.1} parent=1 // loop_footer
      %s16 = sadd.s32 1, %s12
    $region7: #{tpu_custom_call.1} parent=1 // loop_footer_branch
      %11 = sbr.rel target = $region3
    $region8: #{tpu_custom_call.1} parent=1 // loop_exit
      _
    %1180 = vsyncpa [#allocation3], 1
    %s1181 = scalar_lea.sflag [#allocation3], 1
    %1182 = vsyncpa %s1181, 1

</llo_original>
